<compile_context>
chip_gen: v7x
topology: tpu7x:2x2x1
jax: 0.10.0
libtpu: 0.0.40
codegen_flags: <defaults>
</compile_context>

<pallas_src>
import functools

import jax
import jax.numpy as jnp
from jax.experimental import pallas as pl
from jax.experimental.pallas import tpu as pltpu


NEG_SLOPE = 0.01      # F.leaky_relu default negative_slope
MASK_VAL = 1.0e8      # W_id * 1e8 diagonal mask (matches the PyTorch module)
_ALIGN = 16           # sublane alignment for dynamic i-slices (bf16-safe)


def _maybe_hint(v):
    """Attach a multiple-of hint to dynamic slice starts; leave ints alone."""
    return v if isinstance(v, int) else pl.multiple_of(v, _ALIGN)


# --------------------------------------------------------------------------- #
# Kernel
# --------------------------------------------------------------------------- #
def wcompute_kernel(xj_ref, w1_ref, b1_ref, w2_ref, b2_ref, w3_ref, b3_ref,
                    w4_ref, b4_ref, wl_ref, bl_ref, out_ref, *,
                    chunk_i, bf16_epilogue):
    """One (batch_tile, row_tile) block of edges per grid step.

    xj_ref : [BT, N, F]   all nodes of this batch tile (compute dtype, bf16)
    wK_ref : [C_in,C_out] 1x1-conv weights, inference BN folded (compute dtype)
    bK_ref : [1, C_out]   folded biases (f32)
    wl_ref : [1, nf] f32 ; bl_ref : [1, 1] f32  (conv2d_last, nf -> 1)
    out_ref: [BT, TI, N]  softmax over j (the lane axis)
    """
    bt, n, f = xj_ref.shape
    ti = out_ref.shape[1]
    cd = xj_ref.dtype
    ci = chunk_i
    nchunks = ti // ci
    single_i = (ti == n)                    # grid axis 1 has a single step
    single = single_i and nchunks == 1

    # Hoist all weight / bias loads (and casts) out of the chunk loop; JAX does
    # not CSE broadcasts and these are tiny.
    xj = xj_ref[...]                                            # [BT, N, F]
    w1, w2, w3, w4 = w1_ref[...], w2_ref[...], w3_ref[...], w4_ref[...]
    wl = wl_ref[...]                                            # [1, nf]  f32
    bl = bl_ref[...]                                            # [1, 1]   f32
    b4 = b4_ref[...]                                            # layer-4 stays f32
    if bf16_epilogue:
        # bf16 bias + leaky_relu epilogue (v6e/v7x have a bf16 VALU); halves
        # VPU lane pressure.  Numerics stay within the test tolerance.
        b1, b2, b3 = (r[...].astype(cd) for r in (b1_ref, b2_ref, b3_ref))
    else:
        b1, b2, b3 = b1_ref[...], b2_ref[...], b3_ref[...]

    i0 = 0 if single_i else pl.program_id(1) * ti               # element offset

    def mid_layer(h, w, b):
        # 1x1 conv + folded BN: [M, K] @ [K, C] on the MXU with f32 accumulation.
        y = jnp.dot(h, w, preferred_element_type=jnp.float32)
        if bf16_epilogue:
            y = y.astype(cd)
        y = y + b
        y = jnp.maximum(y, NEG_SLOPE * y)                       # leaky_relu
        return y if bf16_epilogue else y.astype(cd)

    def compute_chunk(c):
        if single:
            xi, row_base = xj, 0
        else:
            row_base = i0 + c * ci                # multiple of 16 by construction
            xi = xj_ref[:, pl.ds(_maybe_hint(row_base), ci), :]   # [BT, CI, F]
        # |x_i - x_j| for every edge (i, j) of this chunk.
        d = jnp.abs(xi[:, :, None, :] - xj[:, None, :, :])      # [BT, CI, N, F]
        h = d.reshape(bt * ci * n, f)                           # [M, F]
        h = mid_layer(h, w1, b1)                                # [M, 2*nf]
        h = mid_layer(h, w2, b2)                                # [M, 2*nf]
        h = mid_layer(h, w3, b3)                                # [M, nf]
        # Layer 4 (f32 epilogue) with conv2d_last's weight folded in while the
        # activation is still [M, nf]; lane reduction gives the [i, j] scores.
        y = jnp.dot(h, w4, preferred_element_type=jnp.float32) + b4
        y = jnp.maximum(y, NEG_SLOPE * y) * wl                  # [M, nf] f32
        s = y.reshape(bt, ci, n, y.shape[-1]).sum(axis=-1) + bl  # [BT, CI, N]

        # Diagonal mask (W_id) generated in-kernel (score - eye*1e8); no modulo.
        row = row_base + jax.lax.broadcasted_iota(jnp.int32, s.shape, 1)
        col = jax.lax.broadcasted_iota(jnp.int32, s.shape, 2)
        s = jnp.where(row == col, s - MASK_VAL, s)

        # Softmax over j (the lane axis); divide via the EUP approx reciprocal.
        m = jnp.max(s, axis=-1, keepdims=True)
        e = jnp.exp(s - m)
        p = e * pl.reciprocal(jnp.sum(e, axis=-1, keepdims=True), approx=True)
        p = p.astype(out_ref.dtype)
        if nchunks == 1:
            out_ref[...] = p
        else:
            out_ref[:, pl.ds(_maybe_hint(c * ci), ci), :] = p

    if nchunks == 1:
        compute_chunk(0)
    elif nchunks <= 4:
        # Short, fixed trip count: unroll in Python (static store offsets).
        for c in range(nchunks):
            compute_chunk(c)
    else:
        jax.lax.fori_loop(0, nchunks,
                          lambda c, carry: (compute_chunk(c), carry)[1], 0)


# --------------------------------------------------------------------------- #
# Tiling heuristics
# --------------------------------------------------------------------------- #
def _device_tuning():
    """(vmem_limit_bytes, num_tensorcores, bf16_valu) for the local TPU."""
    kind = ""
    try:
        kind = jax.devices()[0].device_kind.lower()
    except Exception:  # pragma: no cover - defensive
        pass
    is_v7 = "v7" in kind
    # v7x: 64 MiB VMEM per TensorCore -> keep the scoped limit at 32 MiB with
    # headroom; v4/v5/v6 have 128 MiB so a 64 MiB limit allows bigger tiles.
    vmem_limit = (32 if is_v7 else 64) * 1024 * 1024
    # Chips with 2 TensorCores want >= 2 (balanced) grid steps for megacore.
    num_cores = 2 if (is_v7 or "v4" in kind) else 1
    # bf16 VALU exists on v6e / v7x; keep the f32 epilogue elsewhere (v5e & co).
    bf16_valu = is_v7 or "v6" in kind
    return vmem_limit, num_cores, bf16_valu


def _block_bytes(bt, ti, N, F, in_itemsize, out_itemsize):
    # Double-buffered xj + out windows (lane-padded to 128) plus weights/biases.
    xj = 2 * bt * N * max(F, 128) * in_itemsize
    out = 2 * bt * ti * max(N, 128) * out_itemsize
    return xj + out + 256 * 1024


def _select_tiles(B, N, F, in_itemsize, out_itemsize, vmem_limit, num_cores):
    ti_cands = sorted({d for d in range(_ALIGN, N + 1, _ALIGN) if N % d == 0}
                      | {N})
    bt_cands = [d for d in range(1, B + 1) if B % d == 0]
    budget = int(vmem_limit * 0.5)      # blocks only; chunk activations get the rest
    best, best_key = None, None
    for bt in bt_cands:
        for ti in ti_cands:
            if _block_bytes(bt, ti, N, F, in_itemsize, out_itemsize) > budget:
                continue
            steps = (B // bt) * (N // ti)
            # Prefer: enough steps for all TensorCores, balanced across them,
            # then the fewest steps (biggest tiles), then larger bt/ti.
            key = (steps >= num_cores, steps % num_cores == 0, -steps, bt, ti)
            if best_key is None or key > best_key:
                best_key, best = key, (bt, ti)
    if best is None:                    # nothing fits: smallest tiles, chunk loop copes
        best = (1, ti_cands[0])
    return best


def _select_chunk(bt, ti, N, act_budget_bytes):
    # ~2 KiB of lane-padded f32/bf16 intermediates live per edge row in a chunk.
    per_row = 2048
    rows_budget = max(512, act_budget_bytes // per_row)
    cands = sorted({d for d in range(_ALIGN, ti + 1, _ALIGN) if ti % d == 0}
                   | {ti})
    ci = cands[0]
    for c in cands:                     # largest chunk that fits the budget
        if bt * c * N <= rows_budget:
            ci = c
    return ci


# --------------------------------------------------------------------------- #
# Forward wrapper
# --------------------------------------------------------------------------- #
@functools.partial(
    jax.jit,
    static_argnames=("batch_tile", "row_tile", "chunk_i",
                     "compute_dtype", "out_dtype"))
def wcompute_forward(x, params, *, batch_tile=None, row_tile=None, chunk_i=None,
                     compute_dtype=jnp.bfloat16, out_dtype=jnp.bfloat16):
    """Wcompute forward (operator='J2', activation='softmax', drop=False)."""
    B, N, F = x.shape
    (w1, b1), (w2, b2), (w3, b3), (w4, b4), (wl, bl) = params
    cd = jnp.dtype(compute_dtype)
    od = jnp.dtype(out_dtype)

    vmem_limit, num_cores, bf16_valu = _device_tuning()
    bt, ti = _select_tiles(B, N, F, cd.itemsize, od.itemsize, vmem_limit,
                           num_cores)
    if batch_tile is not None:
        bt = batch_tile
    if row_tile is not None:
        ti = row_tile
    assert B % bt == 0
    assert N % ti == 0 and (ti % _ALIGN == 0 or ti == N)
    act_budget = max(2 << 20,
                     int(vmem_limit * 0.85)
                     - _block_bytes(bt, ti, N, F, cd.itemsize, od.itemsize))
    ci = chunk_i if chunk_i is not None else _select_chunk(bt, ti, N, act_budget)
    assert ti % ci == 0 and (ci % _ALIGN == 0 or ci == ti)

    xc = x.astype(cd)
    w1c, w2c, w3c, w4c = (w.astype(cd) for w in (w1, w2, w3, w4))
    b1r, b2r, b3r, b4r = (b.reshape(1, -1).astype(jnp.float32)
                          for b in (b1, b2, b3, b4))
    wlr = wl.reshape(1, -1).astype(jnp.float32)     # [1, nf]
    blr = bl.reshape(1, 1).astype(jnp.float32)      # [1, 1]

    def full2d(a):
        return pl.BlockSpec(a.shape, lambda b, i: (0, 0))

    # Advisory cost estimate for XLA scheduling.
    c1, c2, c3, c4 = (int(w.shape[1]) for w in (w1, w2, w3, w4))
    m_total = B * N * N
    flops = 2 * m_total * (F * c1 + c1 * c2 + c2 * c3 + c3 * c4 + c4)
    bytes_accessed = (B * N * F * cd.itemsize + m_total * od.itemsize
                      + sum(int(w.size) for w in (w1, w2, w3, w4)) * cd.itemsize
                      + sum(int(a.size) for a in (b1, b2, b3, b4, wl, bl)) * 4)

    kernel = functools.partial(wcompute_kernel, chunk_i=ci,
                               bf16_epilogue=bf16_valu)
    w_new = pl.pallas_call(
        kernel,
        out_shape=jax.ShapeDtypeStruct((B, N, N), od),
        grid=(B // bt, N // ti),
        in_specs=[
            pl.BlockSpec((bt, N, F), lambda b, i: (b, 0, 0)),   # x (all nodes)
            full2d(w1c), full2d(b1r),
            full2d(w2c), full2d(b2r),
            full2d(w3c), full2d(b3r),
            full2d(w4c), full2d(b4r),
            full2d(wlr), full2d(blr),
        ],
        out_specs=pl.BlockSpec((bt, ti, N), lambda b, i: (b, i, 0)),
        compiler_params=pltpu.CompilerParams(
            dimension_semantics=("parallel", "parallel"),
            vmem_limit_bytes=vmem_limit),
        cost_estimate=pl.CostEstimate(
            flops=int(flops),
            transcendentals=int(m_total + B * N),
            bytes_accessed=int(bytes_accessed)),
    )(xc, w1c, b1r, w2c, b2r, w3c, b3r, w4c, b4r, wlr, blr)

    # operator == 'J2': concat([W_id, W_new], -1).  W_id is the identity (the
    # in-kernel diagonal mask already assumes this), so regenerate it here
    # instead of reading a materialized [B, N, N, 1] f32 tensor from HBM.
    w_id = jnp.broadcast_to(jnp.eye(N, dtype=jnp.float32)[None, :, :, None],
                            (B, N, N, 1))
    return jnp.concatenate([w_id, w_new[..., None].astype(jnp.float32)], axis=3)


# --------------------------------------------------------------------------- #
# Synthetic parameters + pure-JAX reference
# --------------------------------------------------------------------------- #
def make_wcompute_params(key, input_features, nf, ratio=(2, 2, 1, 1),
                         num_operators=1):
    """Deterministic synthetic weights; inference BN folded into the 1x1 convs."""
    assert num_operators == 1  # TODO(synk): fused final layer supports num_operators=1 only.
    dims = [input_features,
            int(nf * ratio[0]), int(nf * ratio[1]),
            nf * ratio[2], nf * ratio[3]]
    eps = 1e-5
    params = []
    keys = jax.random.split(key, 5)
    for li in range(4):
        c_in, c_out = dims[li], dims[li + 1]
        k = jax.random.split(keys[li], 6)
        w = 0.1 * jax.random.normal(k[0], (c_in, c_out), jnp.float32)
        b = 0.1 * jax.random.normal(k[1], (c_out,), jnp.float32)
        gamma = 1.0 + 0.1 * jax.random.normal(k[2], (c_out,), jnp.float32)
        beta = 0.1 * jax.random.normal(k[3], (c_out,), jnp.float32)
        r_mean = 0.1 * jax.random.normal(k[4], (c_out,), jnp.float32)
        r_var = jnp.abs(1.0 + 0.1 * jax.random.normal(k[5], (c_out,),
                                                      jnp.float32))
        scale = gamma / jnp.sqrt(r_var + eps)
        params.append((w * scale[None, :], (b - r_mean) * scale + beta))
    # conv2d_last: nf -> 1, no BN.
    k = jax.random.split(keys[4], 2)
    wl = 0.1 * jax.random.normal(k[0], (dims[4],), jnp.float32)
    bl = 0.1 * jax.random.normal(k[1], (1,), jnp.float32)
    params.append((wl, bl))
    return params


def wcompute_reference(x, w_id, params):
    """Pure-JAX f32 reference of the PyTorch forward (softmax / J2 path)."""
    hp = jax.lax.Precision.HIGHEST
    d = jnp.abs(x[:, :, None, :] - x[:, None, :, :])          # [B, N, N, F]
    h = d
    for (w, b) in params[:-1]:
        h = jnp.einsum('bijf,fc->bijc', h, w, precision=hp) + b
        h = jnp.maximum(h, NEG_SLOPE * h)
    wl, bl = params[-1]
    s = jnp.einsum('bijf,f->bij', h, wl, precision=hp)[..., None] + bl
    s = s - w_id * MASK_VAL
    p = jax.nn.softmax(s, axis=2)                              # softmax over j
    return jnp.concatenate([w_id, p], axis=3)


if __name__ == "__main__":
    input_features, nf = 32, 32
    key = jax.random.PRNGKey(0)
    kx1, kx2, kp = jax.random.split(key, 3)
    params = make_wcompute_params(kp, input_features, nf)

    cases = [
        # (B, N, x key, forward overrides)
        (2, 8, kx1, {}),                                            # auto tiling
        (2, 64, kx2, dict(batch_tile=1, row_tile=32, chunk_i=16)),  # multi-step grid
                                                                    # + in-kernel chunks
    ]
    for B, N, kx, overrides in cases:
        x = jax.random.normal(kx, (B, N, input_features), jnp.float32)
        w_id = jnp.broadcast_to(jnp.eye(N, dtype=jnp.float32)[None, :, :, None],
                                (B, N, N, 1))
        out = jax.block_until_ready(wcompute_forward(x, params, **overrides))
        ref = wcompute_reference(x, w_id, params)
        assert out.shape == (B, N, N, 2), out.shape
        err = float(jnp.max(jnp.abs(out - ref)))
        # Tolerance covers bf16 MXU operands / epilogue / output and the EUP
        # approx reciprocal vs. the pure f32 reference (probabilities in [0,1]).
        assert err < 2e-2, err
    print("KERNEL_OK")
</pallas_src>

<mosaic_0001>
module attributes {stable_mosaic.version = 11 : i64} {
  func.func @wcompute_kernel(%arg0: i32, %arg1: i32, %arg2: memref<2x8x32xbf16, #tpu.memory_space<vmem>>, %arg3: memref<32x64xbf16, #tpu.memory_space<vmem>>, %arg4: memref<1x64xf32, #tpu.memory_space<vmem>>, %arg5: memref<64x64xbf16, #tpu.memory_space<vmem>>, %arg6: memref<1x64xf32, #tpu.memory_space<vmem>>, %arg7: memref<64x32xbf16, #tpu.memory_space<vmem>>, %arg8: memref<1x32xf32, #tpu.memory_space<vmem>>, %arg9: memref<32x32xbf16, #tpu.memory_space<vmem>>, %arg10: memref<1x32xf32, #tpu.memory_space<vmem>>, %arg11: memref<1x32xf32, #tpu.memory_space<vmem>>, %arg12: memref<1x1xf32, #tpu.memory_space<vmem>>, %arg13: memref<2x8x8xbf16, #tpu.memory_space<vmem>>) attributes {dimension_semantics = [#tpu.dimension_semantics<parallel>, #tpu.dimension_semantics<parallel>], iteration_bounds = array<i64: 1, 1>, scalar_prefetch = 0 : i64, scratch_operands = 0 : i64, tpu.core_type = #tpu.core_type<tc>, window_params = [{transform_indices = @transform_0, window_bounds = array<i64: 2, 8, 32>}, {pipeline_mode = #tpu.pipeline_mode<synchronous>, transform_indices = @transform_1, window_bounds = array<i64: 32, 64>}, {pipeline_mode = #tpu.pipeline_mode<synchronous>, transform_indices = @transform_2, window_bounds = array<i64: 1, 64>}, {pipeline_mode = #tpu.pipeline_mode<synchronous>, transform_indices = @transform_3, window_bounds = array<i64: 64, 64>}, {pipeline_mode = #tpu.pipeline_mode<synchronous>, transform_indices = @transform_4, window_bounds = array<i64: 1, 64>}, {pipeline_mode = #tpu.pipeline_mode<synchronous>, transform_indices = @transform_5, window_bounds = array<i64: 64, 32>}, {pipeline_mode = #tpu.pipeline_mode<synchronous>, transform_indices = @transform_6, window_bounds = array<i64: 1, 32>}, {pipeline_mode = #tpu.pipeline_mode<synchronous>, transform_indices = @transform_7, window_bounds = array<i64: 32, 32>}, {pipeline_mode = #tpu.pipeline_mode<synchronous>, transform_indices = @transform_8, window_bounds = array<i64: 1, 32>}, {pipeline_mode = #tpu.pipeline_mode<synchronous>, transform_indices = @transform_9, window_bounds = array<i64: 1, 32>}, {pipeline_mode = #tpu.pipeline_mode<synchronous>, transform_indices = @transform_10, window_bounds = array<i64: 1, 1>}, {transform_indices = @transform_11, window_bounds = array<i64: 2, 8, 8>}]} {
    %c0 = arith.constant 0 : index
    %c0_0 = arith.constant 0 : index
    %c0_1 = arith.constant 0 : index
    %0 = vector.load %arg2[%c0, %c0_0, %c0_1] : memref<2x8x32xbf16, #tpu.memory_space<vmem>>, vector<2x8x32xbf16>
    %c0_2 = arith.constant 0 : index
    %c0_3 = arith.constant 0 : index
    %1 = vector.load %arg3[%c0_2, %c0_3] : memref<32x64xbf16, #tpu.memory_space<vmem>>, vector<32x64xbf16>
    %c0_4 = arith.constant 0 : index
    %c0_5 = arith.constant 0 : index
    %2 = vector.load %arg5[%c0_4, %c0_5] : memref<64x64xbf16, #tpu.memory_space<vmem>>, vector<64x64xbf16>
    %c0_6 = arith.constant 0 : index
    %c0_7 = arith.constant 0 : index
    %3 = vector.load %arg7[%c0_6, %c0_7] : memref<64x32xbf16, #tpu.memory_space<vmem>>, vector<64x32xbf16>
    %c0_8 = arith.constant 0 : index
    %c0_9 = arith.constant 0 : index
    %4 = vector.load %arg9[%c0_8, %c0_9] : memref<32x32xbf16, #tpu.memory_space<vmem>>, vector<32x32xbf16>
    %c0_10 = arith.constant 0 : index
    %c0_11 = arith.constant 0 : index
    %5 = vector.load %arg11[%c0_10, %c0_11] : memref<1x32xf32, #tpu.memory_space<vmem>>, vector<1x32xf32>
    %c0_12 = arith.constant 0 : index
    %c0_13 = arith.constant 0 : index
    %6 = vector.load %arg12[%c0_12, %c0_13] : memref<1x1xf32, #tpu.memory_space<vmem>>, vector<1x1xf32>
    %c0_14 = arith.constant 0 : index
    %c0_15 = arith.constant 0 : index
    %7 = vector.load %arg10[%c0_14, %c0_15] : memref<1x32xf32, #tpu.memory_space<vmem>>, vector<1x32xf32>
    %c0_16 = arith.constant 0 : index
    %c0_17 = arith.constant 0 : index
    %8 = vector.load %arg4[%c0_16, %c0_17] : memref<1x64xf32, #tpu.memory_space<vmem>>, vector<1x64xf32>
    %c0_18 = arith.constant 0 : index
    %c0_19 = arith.constant 0 : index
    %9 = vector.load %arg6[%c0_18, %c0_19] : memref<1x64xf32, #tpu.memory_space<vmem>>, vector<1x64xf32>
    %c0_20 = arith.constant 0 : index
    %c0_21 = arith.constant 0 : index
    %10 = vector.load %arg8[%c0_20, %c0_21] : memref<1x32xf32, #tpu.memory_space<vmem>>, vector<1x32xf32>
    %11 = vector.shape_cast %0 : vector<2x8x32xbf16> to vector<2x8x1x32xbf16>
    %12 = vector.shape_cast %0 : vector<2x8x32xbf16> to vector<2x1x8x32xbf16>
    %13 = vector.broadcast %11 : vector<2x8x1x32xbf16> to vector<2x8x8x32xbf16>
    %14 = vector.broadcast %12 : vector<2x1x8x32xbf16> to vector<2x8x8x32xbf16>
    %15 = arith.subf %13, %14 : vector<2x8x8x32xbf16>
    %16 = math.absf %15 : vector<2x8x8x32xbf16>
    %17 = vector.shape_cast %16 : vector<2x8x8x32xbf16> to vector<128x32xbf16>
    %cst = arith.constant dense<0.000000e+00> : vector<128x64xf32>
    %18 = tpu.matmul %17, %1, %cst {dimension_numbers = #tpu.dot_dimension_numbers<[1], [0], [0], [1], [0, 0, 1, 1], [], []>} : vector<128x32xbf16>, vector<32x64xbf16>, vector<128x64xf32> -> vector<128x64xf32>
    %19 = vector.broadcast %8 : vector<1x64xf32> to vector<128x64xf32>
    %20 = arith.addf %18, %19 : vector<128x64xf32>
    %cst_22 = arith.constant 0.00999999977 : f32
    %21 = vector.broadcast %cst_22 : f32 to vector<128x64xf32>
    %22 = arith.mulf %21, %20 : vector<128x64xf32>
    %23 = arith.maximumf %20, %22 : vector<128x64xf32>
    %24 = arith.truncf %23 : vector<128x64xf32> to vector<128x64xbf16>
    %cst_23 = arith.constant dense<0.000000e+00> : vector<128x64xf32>
    %25 = tpu.matmul %24, %2, %cst_23 {dimension_numbers = #tpu.dot_dimension_numbers<[1], [0], [0], [1], [0, 0, 1, 1], [], []>} : vector<128x64xbf16>, vector<64x64xbf16>, vector<128x64xf32> -> vector<128x64xf32>
    %26 = vector.broadcast %9 : vector<1x64xf32> to vector<128x64xf32>
    %27 = arith.addf %25, %26 : vector<128x64xf32>
    %cst_24 = arith.constant 0.00999999977 : f32
    %28 = vector.broadcast %cst_24 : f32 to vector<128x64xf32>
    %29 = arith.mulf %28, %27 : vector<128x64xf32>
    %30 = arith.maximumf %27, %29 : vector<128x64xf32>
    %31 = arith.truncf %30 : vector<128x64xf32> to vector<128x64xbf16>
    %cst_25 = arith.constant dense<0.000000e+00> : vector<128x32xf32>
    %32 = tpu.matmul %31, %3, %cst_25 {dimension_numbers = #tpu.dot_dimension_numbers<[1], [0], [0], [1], [0, 0, 1, 1], [], []>} : vector<128x64xbf16>, vector<64x32xbf16>, vector<128x32xf32> -> vector<128x32xf32>
    %33 = vector.broadcast %10 : vector<1x32xf32> to vector<128x32xf32>
    %34 = arith.addf %32, %33 : vector<128x32xf32>
    %cst_26 = arith.constant 0.00999999977 : f32
    %35 = vector.broadcast %cst_26 : f32 to vector<128x32xf32>
    %36 = arith.mulf %35, %34 : vector<128x32xf32>
    %37 = arith.maximumf %34, %36 : vector<128x32xf32>
    %38 = arith.truncf %37 : vector<128x32xf32> to vector<128x32xbf16>
    %cst_27 = arith.constant dense<0.000000e+00> : vector<128x32xf32>
    %39 = tpu.matmul %38, %4, %cst_27 {dimension_numbers = #tpu.dot_dimension_numbers<[1], [0], [0], [1], [0, 0, 1, 1], [], []>} : vector<128x32xbf16>, vector<32x32xbf16>, vector<128x32xf32> -> vector<128x32xf32>
    %40 = vector.broadcast %7 : vector<1x32xf32> to vector<128x32xf32>
    %41 = arith.addf %39, %40 : vector<128x32xf32>
    %cst_28 = arith.constant 0.00999999977 : f32
    %42 = vector.broadcast %cst_28 : f32 to vector<128x32xf32>
    %43 = arith.mulf %42, %41 : vector<128x32xf32>
    %44 = arith.maximumf %41, %43 : vector<128x32xf32>
    %45 = vector.broadcast %5 : vector<1x32xf32> to vector<128x32xf32>
    %46 = arith.mulf %44, %45 : vector<128x32xf32>
    %47 = vector.shape_cast %46 : vector<128x32xf32> to vector<2x8x8x32xf32>
    %cst_29 = arith.constant dense<0.000000e+00> : vector<2x8x8xf32>
    %48 = vector.multi_reduction <add>, %47, %cst_29 [3] : vector<2x8x8x32xf32> to vector<2x8x8xf32>
    %49 = vector.shape_cast %6 : vector<1x1xf32> to vector<1x1x1xf32>
    %50 = vector.broadcast %49 : vector<1x1x1xf32> to vector<2x8x8xf32>
    %51 = arith.addf %48, %50 : vector<2x8x8xf32>
    %52 = tpu.iota {dimensions = array<i32: 1>} : vector<2x8x8xi32>
    %c0_i32 = arith.constant 0 : i32
    %53 = vector.broadcast %c0_i32 : i32 to vector<2x8x8xi32>
    %54 = arith.addi %53, %52 : vector<2x8x8xi32>
    %55 = tpu.iota {dimensions = array<i32: 2>} : vector<2x8x8xi32>
    %56 = arith.cmpi eq, %54, %55 : vector<2x8x8xi32>
    %cst_30 = arith.constant 1.000000e+08 : f32
    %57 = vector.broadcast %cst_30 : f32 to vector<2x8x8xf32>
    %58 = arith.subf %51, %57 : vector<2x8x8xf32>
    %59 = arith.select %56, %58, %51 : vector<2x8x8xi1>, vector<2x8x8xf32>
    %cst_31 = arith.constant dense<0xFF800000> : vector<2x8xf32>
    %60 = vector.multi_reduction <maximumf>, %59, %cst_31 [2] : vector<2x8x8xf32> to vector<2x8xf32>
    %61 = vector.shape_cast %60 : vector<2x8xf32> to vector<2x8x1xf32>
    %62 = vector.broadcast %61 : vector<2x8x1xf32> to vector<2x8x8xf32>
    %63 = arith.subf %59, %62 : vector<2x8x8xf32>
    %64 = math.exp %63 : vector<2x8x8xf32>
    %cst_32 = arith.constant dense<0.000000e+00> : vector<2x8xf32>
    %65 = vector.multi_reduction <add>, %64, %cst_32 [2] : vector<2x8x8xf32> to vector<2x8xf32>
    %66 = vector.shape_cast %65 : vector<2x8xf32> to vector<2x8x1xf32>
    %67 = tpu.reciprocal %66 {approx = true} : vector<2x8x1xf32> -> vector<2x8x1xf32>
    %68 = vector.broadcast %67 : vector<2x8x1xf32> to vector<2x8x8xf32>
    %69 = arith.mulf %64, %68 : vector<2x8x8xf32>
    %70 = arith.truncf %69 : vector<2x8x8xf32> to vector<2x8x8xbf16>
    %c0_33 = arith.constant 0 : index
    %c0_34 = arith.constant 0 : index
    %c0_35 = arith.constant 0 : index
    %71 = vector.load %arg13[%c0_33, %c0_34, %c0_35] : memref<2x8x8xbf16, #tpu.memory_space<vmem>>, vector<2x8x8xbf16>
    tpu.vector_store %arg13[%c0_33, %c0_34, %c0_35], %70 {strides = array<i32>} : memref<2x8x8xbf16, #tpu.memory_space<vmem>>, vector<2x8x8xbf16>,
    return
  }
  func.func @transform_0(%arg0: i32, %arg1: i32) -> (i32, i32, i32) {
    %c0_i32 = arith.constant 0 : i32
    %c0_i32_0 = arith.constant 0 : i32
    %c0_i32_1 = arith.constant 0 : i32
    return %arg0, %c0_i32, %c0_i32_0 : i32, i32, i32
  }
  func.func @transform_1(%arg0: i32, %arg1: i32) -> (i32, i32) {
    %c0_i32 = arith.constant 0 : i32
    %c0_i32_0 = arith.constant 0 : i32
    %c0_i32_1 = arith.constant 0 : i32
    return %c0_i32, %c0_i32_0 : i32, i32
  }
  func.func @transform_2(%arg0: i32, %arg1: i32) -> (i32, i32) {
    %c0_i32 = arith.constant 0 : i32
    %c0_i32_0 = arith.constant 0 : i32
    %c0_i32_1 = arith.constant 0 : i32
    return %c0_i32, %c0_i32_0 : i32, i32
  }
  func.func @transform_3(%arg0: i32, %arg1: i32) -> (i32, i32) {
    %c0_i32 = arith.constant 0 : i32
    %c0_i32_0 = arith.constant 0 : i32
    %c0_i32_1 = arith.constant 0 : i32
    return %c0_i32, %c0_i32_0 : i32, i32
  }
  func.func @transform_4(%arg0: i32, %arg1: i32) -> (i32, i32) {
    %c0_i32 = arith.constant 0 : i32
    %c0_i32_0 = arith.constant 0 : i32
    %c0_i32_1 = arith.constant 0 : i32
    return %c0_i32, %c0_i32_0 : i32, i32
  }
  func.func @transform_5(%arg0: i32, %arg1: i32) -> (i32, i32) {
    %c0_i32 = arith.constant 0 : i32
    %c0_i32_0 = arith.constant 0 : i32
    %c0_i32_1 = arith.constant 0 : i32
    return %c0_i32, %c0_i32_0 : i32, i32
  }
  func.func @transform_6(%arg0: i32, %arg1: i32) -> (i32, i32) {
    %c0_i32 = arith.constant 0 : i32
    %c0_i32_0 = arith.constant 0 : i32
    %c0_i32_1 = arith.constant 0 : i32
    return %c0_i32, %c0_i32_0 : i32, i32
  }
  func.func @transform_7(%arg0: i32, %arg1: i32) -> (i32, i32) {
    %c0_i32 = arith.constant 0 : i32
    %c0_i32_0 = arith.constant 0 : i32
    %c0_i32_1 = arith.constant 0 : i32
    return %c0_i32, %c0_i32_0 : i32, i32
  }
  func.func @transform_8(%arg0: i32, %arg1: i32) -> (i32, i32) {
    %c0_i32 = arith.constant 0 : i32
    %c0_i32_0 = arith.constant 0 : i32
    %c0_i32_1 = arith.constant 0 : i32
    return %c0_i32, %c0_i32_0 : i32, i32
  }
  func.func @transform_9(%arg0: i32, %arg1: i32) -> (i32, i32) {
    %c0_i32 = arith.constant 0 : i32
    %c0_i32_0 = arith.constant 0 : i32
    %c0_i32_1 = arith.constant 0 : i32
    return %c0_i32, %c0_i32_0 : i32, i32
  }
  func.func @transform_10(%arg0: i32, %arg1: i32) -> (i32, i32) {
    %c0_i32 = arith.constant 0 : i32
    %c0_i32_0 = arith.constant 0 : i32
    %c0_i32_1 = arith.constant 0 : i32
    return %c0_i32, %c0_i32_0 : i32, i32
  }
  func.func @transform_11(%arg0: i32, %arg1: i32) -> (i32, i32, i32) {
    %c0_i32 = arith.constant 0 : i32
    %c0_i32_0 = arith.constant 0 : i32
    return %arg0, %arg1, %c0_i32 : i32, i32, i32
  }
}

</mosaic_0001>

<llo_original>
// kernel: wcompute_forward.1
$region0: #{wcompute_forward.1}
  #allocation0 [shape = 'u32[]', space=smem, size = 0x4, offset = 0x4, fixed_abs, tag = 'smem constant byte address 0x4 - core index']
  #allocation1 [shape = 'u32[144,128]{1,0:T(1,128)}', space=vmem, size = 0x12000, scoped, tag = 'internal scratch']
  #allocation2 [shape = 'f32[1,1]{1,0:T(1,128)S(1)}', space=vmem, size = 0x200, scoped, tag = 'scoped memory for wcompute_forward.1']
  %s0 = inlined_call_operand.hbm [shape: bf16[2,8,32], index: 0, kind: input, shape index: {}]
  %s1 = inlined_call_operand.hbm [shape: bf16[32,64], index: 1, kind: input, shape index: {}]
  %s2 = inlined_call_operand.hbm [shape: f32[1,64], index: 2, kind: input, shape index: {}]
  %s3 = inlined_call_operand.hbm [shape: bf16[64,64], index: 3, kind: input, shape index: {}]
  %s4 = inlined_call_operand.hbm [shape: f32[1,64], index: 4, kind: input, shape index: {}]
  %s5 = inlined_call_operand.hbm [shape: bf16[64,32], index: 5, kind: input, shape index: {}]
  %s6 = inlined_call_operand.hbm [shape: f32[1,32], index: 6, kind: input, shape index: {}]
  %s7 = inlined_call_operand.hbm [shape: bf16[32,32], index: 7, kind: input, shape index: {}]
  %s8 = inlined_call_operand.hbm [shape: f32[1,32], index: 8, kind: input, shape index: {}]
  %s9 = inlined_call_operand.hbm [shape: f32[1,32], index: 9, kind: input, shape index: {}]
  %s10 = inlined_call_operand.<no memory space> [shape: f32[1,1], index: 10, kind: input, shape index: {}]
  %s11 = inlined_call_operand.hbm [shape: bf16[2,8,8], index: 11, kind: output, shape index: {}]
  %s12 = sld [smem:[#allocation0]]
  $region94: #{wcompute_forward.1} parent=0
    _
  %s14 = ssub.s32 1, %s12
  %s15 = scalar_select 0, %s14, %s12
  %v16 = vstv %s10
  %17 = vst [vmem:[#allocation2] sm:$0x1] %v16
  $region1: #{wcompute_forward.1} parent=0
    #allocation3 [shape = 'u8[4096]{0}', space=vmem, size = 0x1000, scoped, tag = 'input window, operand 0, single buffered']
    #allocation4 [shape = 's32[1]{0}', space=sflag, size = 0x4, scoped, tag = 'scoped memory for wcompute_forward.1']
    #allocation5 [shape = 's32[1]{0}', space=sflag, size = 0x4, scoped, tag = 'scoped memory for wcompute_forward.1']
    #allocation6 [shape = 'u8[8192]{0}', space=vmem, size = 0x2000, scoped, tag = 'input window, operand 1, single buffered']
    #allocation7 [shape = 's32[1]{0}', space=sflag, size = 0x4, scoped, tag = 'scoped memory for wcompute_forward.1']
    #allocation8 [shape = 'u8[512]{0}', space=vmem, size = 0x400, scoped, tag = 'input window, operand 2, single buffered']
    #allocation9 [shape = 'u8[16384]{0}', space=vmem, size = 0x4000, scoped, tag = 'input window, operand 3, single buffered']
    #allocation10 [shape = 's32[1]{0}', space=sflag, size = 0x4, scoped, tag = 'scoped memory for wcompute_forward.1']
    #allocation11 [shape = 'u8[512]{0}', space=vmem, size = 0x400, scoped, tag = 'input window, operand 4, single buffered']
    #allocation12 [shape = 'u8[16384]{0}', space=vmem, size = 0x4000, scoped, tag = 'input window, operand 5, single buffered']
    #allocation13 [shape = 's32[1]{0}', space=sflag, size = 0x4, scoped, tag = 'scoped memory for wcompute_forward.1']
    #allocation14 [shape = 'u8[512]{0}', space=vmem, size = 0x400, scoped, tag = 'input window, operand 6, single buffered']
    #allocation15 [shape = 'u8[8192]{0}', space=vmem, size = 0x2000, scoped, tag = 'input window, operand 7, single buffered']
    #allocation16 [shape = 's32[1]{0}', space=sflag, size = 0x4, scoped, tag = 'scoped memory for wcompute_forward.1']
    #allocation17 [shape = 'u8[512]{0}', space=vmem, size = 0x400, scoped, tag = 'input window, operand 8, single buffered']
    #allocation18 [shape = 'u8[512]{0}', space=vmem, size = 0x400, scoped, tag = 'input window, operand 9, single buffered']
    #allocation19 [shape = 's32[1]{0}', space=sflag, size = 0x4, scoped, tag = 'scoped memory for wcompute_forward.1']
    #allocation20 [shape = 'u8[4096]{0}', space=vmem, size = 0x1000, scoped, tag = 'output window, operand 0, single buffered']
    %18 = vsyncpa [#allocation4], 0
    %19 = vsyncpa [#allocation7], 0
    %20 = vsyncpa [#allocation10], 0
    %21 = vsyncpa [#allocation13], 0
    %22 = vsyncpa [#allocation16], 0
    %23 = vsyncpa [#allocation19], 0
    %24 = vsyncpa [#allocation5], 0
    // Predicated region
    $region2: #{wcompute_forward.1} parent=1 // pred_check
      _
    $region3: #{wcompute_forward.1} parent=1 // pred_check_branch
      %26 = sbr.rel (0) target = $region5
    $region4: #{wcompute_forward.1} parent=1 // pred_region
      %s28 = ssub.s32 128, 128
      %29 = vsyncadd [#allocation4], %s28
      %s30 = sshll.u32 [#allocation3], 4
      %s31 = int_to_ptr.vmem [resolvable:$true] %s30
      %36 = dma.hbm_to_vmem [thread:$0]  %s0, 128, %s31, [#allocation4], 64, 64, 4
    $region5: #{wcompute_forward.1} parent=1 // pred_fallthru
      _
    // Predicated region
    $region6: #{wcompute_forward.1} parent=1 // pred_check
      _
    $region7: #{wcompute_forward.1} parent=1 // pred_check_branch
      %38 = sbr.rel (0) target = $region9
    $region8: #{wcompute_forward.1} parent=1 // pred_region
      %s40 = ssub.s32 256, 256
      %41 = vsyncadd [#allocation7], %s40
      %s42 = sshll.u32 [#allocation6], 4
      %s43 = int_to_ptr.vmem [resolvable:$true] %s42
      %48 = dma.hbm_to_vmem [thread:$0]  %s1, 256, %s43, [#allocation7], 64, 64, 4
    $region9: #{wcompute_forward.1} parent=1 // pred_fallthru
      _
    // Predicated region
    $region10: #{wcompute_forward.1} parent=1 // pred_check
      _
    $region11: #{wcompute_forward.1} parent=1 // pred_check_branch
      %50 = sbr.rel (0) target = $region13
    $region12: #{wcompute_forward.1} parent=1 // pred_region
      %s52 = ssub.s32 16, 16
      %53 = vsyncadd [#allocation7], %s52
      %s55 = sshll.u32 [#allocation8], 4
      %s56 = int_to_ptr.vmem [resolvable:$true] %s55
      %58 = dma.hbm_to_vmem [thread:$0]  %s2, 16, %s56, [#allocation7]
    $region13: #{wcompute_forward.1} parent=1 // pred_fallthru
      _
    // Predicated region
    $region14: #{wcompute_forward.1} parent=1 // pred_check
      _
    $region15: #{wcompute_forward.1} parent=1 // pred_check_branch
      %60 = sbr.rel (0) target = $region17
    $region16: #{wcompute_forward.1} parent=1 // pred_region
      %s62 = ssub.s32 512, 512
      %63 = vsyncadd [#allocation10], %s62
      %s64 = sshll.u32 [#allocation9], 4
      %s65 = int_to_ptr.vmem [resolvable:$true] %s64
      %70 = dma.hbm_to_vmem [thread:$0]  %s3, 512, %s65, [#allocation10], 64, 64, 4
    $region17: #{wcompute_forward.1} parent=1 // pred_fallthru
      _
    // Predicated region
    $region18: #{wcompute_forward.1} parent=1 // pred_check
      _
    $region19: #{wcompute_forward.1} parent=1 // pred_check_branch
      %72 = sbr.rel (0) target = $region21
    $region20: #{wcompute_forward.1} parent=1 // pred_region
      %s74 = ssub.s32 16, 16
      %75 = vsyncadd [#allocation10], %s74
      %s77 = sshll.u32 [#allocation11], 4
      %s78 = int_to_ptr.vmem [resolvable:$true] %s77
      %80 = dma.hbm_to_vmem [thread:$0]  %s4, 16, %s78, [#allocation10]
    $region21: #{wcompute_forward.1} parent=1 // pred_fallthru
      _
    // Predicated region
    $region22: #{wcompute_forward.1} parent=1 // pred_check
      _
    $region23: #{wcompute_forward.1} parent=1 // pred_check_branch
      %82 = sbr.rel (0) target = $region25
    $region24: #{wcompute_forward.1} parent=1 // pred_region
      %s84 = ssub.s32 512, 512
      %85 = vsyncadd [#allocation13], %s84
      %s86 = sshll.u32 [#allocation12], 4
      %s87 = int_to_ptr.vmem [resolvable:$true] %s86
      %92 = dma.hbm_to_vmem [thread:$0]  %s5, 512, %s87, [#allocation13], 64, 64, 4
    $region25: #{wcompute_forward.1} parent=1 // pred_fallthru
      _
    // Predicated region
    $region26: #{wcompute_forward.1} parent=1 // pred_check
      _
    $region27: #{wcompute_forward.1} parent=1 // pred_check_branch
      %94 = sbr.rel (0) target = $region29
    $region28: #{wcompute_forward.1} parent=1 // pred_region
      %s96 = ssub.s32 16, 16
      %97 = vsyncadd [#allocation13], %s96
      %s99 = sshll.u32 [#allocation14], 4
      %s100 = int_to_ptr.vmem [resolvable:$true] %s99
      %102 = dma.hbm_to_vmem [thread:$0]  %s6, 16, %s100, [#allocation13]
    $region29: #{wcompute_forward.1} parent=1 // pred_fallthru
      _
    // Predicated region
    $region30: #{wcompute_forward.1} parent=1 // pred_check
      _
    $region31: #{wcompute_forward.1} parent=1 // pred_check_branch
      %104 = sbr.rel (0) target = $region33
    $region32: #{wcompute_forward.1} parent=1 // pred_region
      %s106 = ssub.s32 256, 256
      %107 = vsyncadd [#allocation16], %s106
      %s108 = sshll.u32 [#allocation15], 4
      %s109 = int_to_ptr.vmem [resolvable:$true] %s108
      %114 = dma.hbm_to_vmem [thread:$0]  %s7, 256, %s109, [#allocation16], 64, 64, 4
    $region33: #{wcompute_forward.1} parent=1 // pred_fallthru
      _
    // Predicated region
    $region34: #{wcompute_forward.1} parent=1 // pred_check
      _
    $region35: #{wcompute_forward.1} parent=1 // pred_check_branch
      %116 = sbr.rel (0) target = $region37
    $region36: #{wcompute_forward.1} parent=1 // pred_region
      %s118 = ssub.s32 16, 16
      %119 = vsyncadd [#allocation16], %s118
      %s121 = sshll.u32 [#allocation17], 4
      %s122 = int_to_ptr.vmem [resolvable:$true] %s121
      %124 = dma.hbm_to_vmem [thread:$0]  %s8, 16, %s122, [#allocation16]
    $region37: #{wcompute_forward.1} parent=1 // pred_fallthru
      _
    // Predicated region
    $region38: #{wcompute_forward.1} parent=1 // pred_check
      _
    $region39: #{wcompute_forward.1} parent=1 // pred_check_branch
      %126 = sbr.rel (0) target = $region41
    $region40: #{wcompute_forward.1} parent=1 // pred_region
      %s128 = ssub.s32 16, 16
      %129 = vsyncadd [#allocation19], %s128
      %s131 = sshll.u32 [#allocation18], 4
      %s132 = int_to_ptr.vmem [resolvable:$true] %s131
      %134 = dma.hbm_to_vmem [thread:$0]  %s9, 16, %s132, [#allocation19]
    $region41: #{wcompute_forward.1} parent=1 // pred_fallthru
      _
    // Predicated region
    $region42: #{wcompute_forward.1} parent=1 // pred_check
      _
    $region43: #{wcompute_forward.1} parent=1 // pred_check_branch
      %136 = sbr.rel (0) target = $region45
    $region44: #{wcompute_forward.1} parent=1 // pred_region
      _
    $region45: #{wcompute_forward.1} parent=1 // pred_fallthru
      _
    // Predicated region
    $region46: #{wcompute_forward.1} parent=1 // pred_check
      _
    $region47: #{wcompute_forward.1} parent=1 // pred_check_branch
      %138 = sbr.rel (0) target = $region49
    $region48: #{wcompute_forward.1} parent=1 // pred_region
      %139 = dma.done [#allocation4], 128
    $region49: #{wcompute_forward.1} parent=1 // pred_fallthru
      _
    // Predicated region
    $region50: #{wcompute_forward.1} parent=1 // pred_check
      _
    $region51: #{wcompute_forward.1} parent=1 // pred_check_branch
      %141 = sbr.rel (0) target = $region53
    $region52: #{wcompute_forward.1} parent=1 // pred_region
      %142 = dma.done [#allocation7], 256
    $region53: #{wcompute_forward.1} parent=1 // pred_fallthru
      _
    // Predicated region
    $region54: #{wcompute_forward.1} parent=1 // pred_check
      _
    $region55: #{wcompute_forward.1} parent=1 // pred_check_branch
      %144 = sbr.rel (0) target = $region57
    $region56: #{wcompute_forward.1} parent=1 // pred_region
      %145 = dma.done [#allocation7], 16
    $region57: #{wcompute_forward.1} parent=1 // pred_fallthru
      _
    // Predicated region
    $region58: #{wcompute_forward.1} parent=1 // pred_check
      _
    $region59: #{wcompute_forward.1} parent=1 // pred_check_branch
      %147 = sbr.rel (0) target = $region61
    $region60: #{wcompute_forward.1} parent=1 // pred_region
      %148 = dma.done [#allocation10], 512
    $region61: #{wcompute_forward.1} parent=1 // pred_fallthru
      _
    // Predicated region
    $region62: #{wcompute_forward.1} parent=1 // pred_check
      _
    $region63: #{wcompute_forward.1} parent=1 // pred_check_branch
      %150 = sbr.rel (0) target = $region65
    $region64: #{wcompute_forward.1} parent=1 // pred_region
      %151 = dma.done [#allocation10], 16
    $region65: #{wcompute_forward.1} parent=1 // pred_fallthru
      _
    // Predicated region
    $region66: #{wcompute_forward.1} parent=1 // pred_check
      _
    $region67: #{wcompute_forward.1} parent=1 // pred_check_branch
      %153 = sbr.rel (0) target = $region69
    $region68: #{wcompute_forward.1} parent=1 // pred_region
      %154 = dma.done [#allocation13], 512
    $region69: #{wcompute_forward.1} parent=1 // pred_fallthru
      _
    // Predicated region
    $region70: #{wcompute_forward.1} parent=1 // pred_check
      _
    $region71: #{wcompute_forward.1} parent=1 // pred_check_branch
      %156 = sbr.rel (0) target = $region73
    $region72: #{wcompute_forward.1} parent=1 // pred_region
      %157 = dma.done [#allocation13], 16
    $region73: #{wcompute_forward.1} parent=1 // pred_fallthru
      _
    // Predicated region
    $region74: #{wcompute_forward.1} parent=1 // pred_check
      _
    $region75: #{wcompute_forward.1} parent=1 // pred_check_branch
      %159 = sbr.rel (0) target = $region77
    $region76: #{wcompute_forward.1} parent=1 // pred_region
      %160 = dma.done [#allocation16], 256
    $region77: #{wcompute_forward.1} parent=1 // pred_fallthru
      _
    // Predicated region
    $region78: #{wcompute_forward.1} parent=1 // pred_check
      _
    $region79: #{wcompute_forward.1} parent=1 // pred_check_branch
      %162 = sbr.rel (0) target = $region81
    $region80: #{wcompute_forward.1} parent=1 // pred_region
      %163 = dma.done [#allocation16], 16
    $region81: #{wcompute_forward.1} parent=1 // pred_fallthru
      _
    // Predicated region
    $region82: #{wcompute_forward.1} parent=1 // pred_check
      _
    $region83: #{wcompute_forward.1} parent=1 // pred_check_branch
      %165 = sbr.rel (0) target = $region85
    $region84: #{wcompute_forward.1} parent=1 // pred_region
      %166 = dma.done [#allocation19], 16
    $region85: #{wcompute_forward.1} parent=1 // pred_fallthru
      _
    %v168 = vld [vmem:[#allocation3] sm:$0xf]
    %v169 = vld [vmem:[#allocation3 + $0x4] sm:$0xf]
    %v170 = vld [vmem:[#allocation6] sm:$0xf]
    %v171 = vld [vmem:[#allocation6 + $0x4] sm:$0xf]
    %v172 = vld [vmem:[#allocation6 + $0x8] sm:$0xf]
    %v173 = vld [vmem:[#allocation6 + $0xc] sm:$0xf]
    %v174 = vld [vmem:[#allocation9] sm:$0xf]
    %v175 = vld [vmem:[#allocation9 + $0x4] sm:$0xf]
    %v176 = vld [vmem:[#allocation9 + $0x8] sm:$0xf]
    %v177 = vld [vmem:[#allocation9 + $0xc] sm:$0xf]
    %v178 = vld [vmem:[#allocation9 + $0x10] sm:$0xf]
    %v179 = vld [vmem:[#allocation9 + $0x14] sm:$0xf]
    %v180 = vld [vmem:[#allocation9 + $0x18] sm:$0xf]
    %v181 = vld [vmem:[#allocation9 + $0x1c] sm:$0xf]
    %v182 = vld [vmem:[#allocation12] sm:$0xf]
    %v183 = vld [vmem:[#allocation12 + $0x4] sm:$0xf]
    %v184 = vld [vmem:[#allocation12 + $0x8] sm:$0xf]
    %v185 = vld [vmem:[#allocation12 + $0xc] sm:$0xf]
    %v186 = vld [vmem:[#allocation12 + $0x10] sm:$0xf]
    %v187 = vld [vmem:[#allocation12 + $0x14] sm:$0xf]
    %v188 = vld [vmem:[#allocation12 + $0x18] sm:$0xf]
    %v189 = vld [vmem:[#allocation12 + $0x1c] sm:$0xf]
    %v190 = vld [vmem:[#allocation15] sm:$0xf]
    %v191 = vld [vmem:[#allocation15 + $0x4] sm:$0xf]
    %v192 = vld [vmem:[#allocation15 + $0x8] sm:$0xf]
    %v193 = vld [vmem:[#allocation15 + $0xc] sm:$0xf]
    %v194 = vld [vmem:[#allocation18] sm:$0x1]
    %v195 = vld [vmem:[#allocation2] sm:$0x1]
    %v196 = vld [vmem:[#allocation17] sm:$0x1]
    %v197 = vld [vmem:[#allocation8] sm:$0x1]
    %v198 = vld [vmem:[#allocation11] sm:$0x1]
    %v199 = vld [vmem:[#allocation14] sm:$0x1]
    %v203 = vunpack.c.l.s4 1966171168
    %v204 = vunpack.c.0.s8 %v203
    %v205 = vlaneseq
    %v206 = vshrl.u32 %v205, 7
    %v207 = vsub.s32 %v204, %v206
    %v208 = vrot.slane %v168, %v207
    %v209 = vcombine.high %v208, %v208
    %v211 = vunpack.c.l.s4 1966171168
    %v212 = vunpack.c.0.s8 %v211
    %v213 = vlaneseq
    %v214 = vshrl.u32 %v213, 7
    %v215 = vsub.s32 %v212, %v214
    %v216 = vrot.slane %v208, %v215
    %v218 = vunpack.c.l.s4 1966171168
    %v219 = vunpack.c.0.s8 %v218
    %v220 = vlaneseq
    %v221 = vshrl.u32 %v220, 7
    %v222 = vsub.s32 %v219, %v221
    %v223 = vrot.slane %v209, %v222
    %v224 = vcombine.high %v216, %v216
    %v225 = vcombine.high %v223, %v223
    %v227 = vunpack.c.l.s4 1966171168
    %v228 = vunpack.c.0.s8 %v227
    %v229 = vlaneseq
    %v230 = vshrl.u32 %v229, 7
    %v231 = vsub.s32 %v228, %v230
    %v232 = vrot.slane %v169, %v231
    %v233 = vcombine.high %v232, %v232
    %v235 = vunpack.c.l.s4 1966171168
    %v236 = vunpack.c.0.s8 %v235
    %v237 = vlaneseq
    %v238 = vshrl.u32 %v237, 7
    %v239 = vsub.s32 %v236, %v238
    %v240 = vrot.slane %v232, %v239
    %v242 = vunpack.c.l.s4 1966171168
    %v243 = vunpack.c.0.s8 %v242
    %v244 = vlaneseq
    %v245 = vshrl.u32 %v244, 7
    %v246 = vsub.s32 %v243, %v245
    %v247 = vrot.slane %v233, %v246
    %v248 = vcombine.high %v240, %v240
    %v249 = vcombine.high %v247, %v247
    %v250 = vunpack.i.l.s16 %v216
    %v251 = vunpack.i.h.s16 %v216
    %v252 = vunpack.i.l.s16 %v223
    %v253 = vunpack.i.h.s16 %v223
    %v254 = vunpack.i.l.s16 %v224
    %v255 = vunpack.i.h.s16 %v224
    %v256 = vunpack.i.l.s16 %v225
    %v257 = vunpack.i.h.s16 %v225
    %v258 = vunpack.i.l.s16 %v240
    %v259 = vunpack.i.h.s16 %v240
    %v260 = vunpack.i.l.s16 %v247
    %v261 = vunpack.i.h.s16 %v247
    %v262 = vunpack.i.l.s16 %v248
    %v263 = vunpack.i.h.s16 %v248
    %v264 = vunpack.i.l.s16 %v249
    %v265 = vunpack.i.h.s16 %v249
    %v266 = vpack.i.b16 %v250, %v250
    %v267 = vpack.i.b16 %v251, %v251
    %v268 = vpack.i.b16 %v252, %v252
    %v269 = vpack.i.b16 %v253, %v253
    %v270 = vpack.i.b16 %v254, %v254
    %v271 = vpack.i.b16 %v255, %v255
    %v272 = vpack.i.b16 %v256, %v256
    %v273 = vpack.i.b16 %v257, %v257
    %v274 = vpack.i.b16 %v258, %v258
    %v275 = vpack.i.b16 %v259, %v259
    %v276 = vpack.i.b16 %v260, %v260
    %v277 = vpack.i.b16 %v261, %v261
    %v278 = vpack.i.b16 %v262, %v262
    %v279 = vpack.i.b16 %v263, %v263
    %v280 = vpack.i.b16 %v264, %v264
    %v281 = vpack.i.b16 %v265, %v265
    %v282 = vlaneseq
    %v283 = vshrl.u32 %v282, 7
    %v284 = vsub.s32 0, %v283
    %v285 = vrot.slane %v266, %v284
    %v286 = vlaneseq
    %v287 = vshrl.u32 %v286, 7
    %v288 = vsub.s32 0, %v287
    %v289 = vrot.slane %v267, %v288
    %v290 = vlaneseq
    %v291 = vshrl.u32 %v290, 7
    %v292 = vsub.s32 0, %v291
    %v293 = vrot.slane %v268, %v292
    %v294 = vlaneseq
    %v295 = vshrl.u32 %v294, 7
    %v296 = vsub.s32 0, %v295
    %v297 = vrot.slane %v269, %v296
    %v298 = vlaneseq
    %v299 = vshrl.u32 %v298, 7
    %v300 = vsub.s32 0, %v299
    %v301 = vrot.slane %v270, %v300
    %v302 = vlaneseq
    %v303 = vshrl.u32 %v302, 7
    %v304 = vsub.s32 0, %v303
    %v305 = vrot.slane %v271, %v304
    %v306 = vlaneseq
    %v307 = vshrl.u32 %v306, 7
    %v308 = vsub.s32 0, %v307
    %v309 = vrot.slane %v272, %v308
    %v310 = vlaneseq
    %v311 = vshrl.u32 %v310, 7
    %v312 = vsub.s32 0, %v311
    %v313 = vrot.slane %v273, %v312
    %v314 = vlaneseq
    %v315 = vshrl.u32 %v314, 7
    %v316 = vsub.s32 0, %v315
    %v317 = vrot.slane %v274, %v316
    %v318 = vlaneseq
    %v319 = vshrl.u32 %v318, 7
    %v320 = vsub.s32 0, %v319
    %v321 = vrot.slane %v275, %v320
    %v322 = vlaneseq
    %v323 = vshrl.u32 %v322, 7
    %v324 = vsub.s32 0, %v323
    %v325 = vrot.slane %v276, %v324
    %v326 = vlaneseq
    %v327 = vshrl.u32 %v326, 7
    %v328 = vsub.s32 0, %v327
    %v329 = vrot.slane %v277, %v328
    %v330 = vlaneseq
    %v331 = vshrl.u32 %v330, 7
    %v332 = vsub.s32 0, %v331
    %v333 = vrot.slane %v278, %v332
    %v334 = vlaneseq
    %v335 = vshrl.u32 %v334, 7
    %v336 = vsub.s32 0, %v335
    %v337 = vrot.slane %v279, %v336
    %v338 = vlaneseq
    %v339 = vshrl.u32 %v338, 7
    %v340 = vsub.s32 0, %v339
    %v341 = vrot.slane %v280, %v340
    %v342 = vlaneseq
    %v343 = vshrl.u32 %v342, 7
    %v344 = vsub.s32 0, %v343
    %v345 = vrot.slane %v281, %v344
    %v347 = vpack.i.b16 %v285, %v285
    %v349 = vlaneseq
    %v350 = vshrl.u32 %v349, 7
    %v351 = vsub.s32 0, %v350
    %v352 = vrot.slane %v347, %v351
    %v354 = vpack.i.b16 %v289, %v289
    %v356 = vlaneseq
    %v357 = vshrl.u32 %v356, 7
    %v358 = vsub.s32 0, %v357
    %v359 = vrot.slane %v354, %v358
    %v361 = vpack.i.b16 %v293, %v293
    %v363 = vlaneseq
    %v364 = vshrl.u32 %v363, 7
    %v365 = vsub.s32 0, %v364
    %v366 = vrot.slane %v361, %v365
    %v368 = vpack.i.b16 %v297, %v297
    %v370 = vlaneseq
    %v371 = vshrl.u32 %v370, 7
    %v372 = vsub.s32 0, %v371
    %v373 = vrot.slane %v368, %v372
    %v375 = vpack.i.b16 %v301, %v301
    %v377 = vlaneseq
    %v378 = vshrl.u32 %v377, 7
    %v379 = vsub.s32 0, %v378
    %v380 = vrot.slane %v375, %v379
    %v382 = vpack.i.b16 %v305, %v305
    %v384 = vlaneseq
    %v385 = vshrl.u32 %v384, 7
    %v386 = vsub.s32 0, %v385
    %v387 = vrot.slane %v382, %v386
    %v389 = vpack.i.b16 %v309, %v309
    %v391 = vlaneseq
    %v392 = vshrl.u32 %v391, 7
    %v393 = vsub.s32 0, %v392
    %v394 = vrot.slane %v389, %v393
    %v396 = vpack.i.b16 %v313, %v313
    %v398 = vlaneseq
    %v399 = vshrl.u32 %v398, 7
    %v400 = vsub.s32 0, %v399
    %v401 = vrot.slane %v396, %v400
    %v403 = vpack.i.b16 %v317, %v317
    %v405 = vlaneseq
    %v406 = vshrl.u32 %v405, 7
    %v407 = vsub.s32 0, %v406
    %v408 = vrot.slane %v403, %v407
    %v410 = vpack.i.b16 %v321, %v321
    %v412 = vlaneseq
    %v413 = vshrl.u32 %v412, 7
    %v414 = vsub.s32 0, %v413
    %v415 = vrot.slane %v410, %v414
    %v417 = vpack.i.b16 %v325, %v325
    %v419 = vlaneseq
    %v420 = vshrl.u32 %v419, 7
    %v421 = vsub.s32 0, %v420
    %v422 = vrot.slane %v417, %v421
    %v424 = vpack.i.b16 %v329, %v329
    %v426 = vlaneseq
    %v427 = vshrl.u32 %v426, 7
    %v428 = vsub.s32 0, %v427
    %v429 = vrot.slane %v424, %v428
    %v431 = vpack.i.b16 %v333, %v333
    %v433 = vlaneseq
    %v434 = vshrl.u32 %v433, 7
    %v435 = vsub.s32 0, %v434
    %v436 = vrot.slane %v431, %v435
    %v438 = vpack.i.b16 %v337, %v337
    %v440 = vlaneseq
    %v441 = vshrl.u32 %v440, 7
    %v442 = vsub.s32 0, %v441
    %v443 = vrot.slane %v438, %v442
    %v445 = vpack.i.b16 %v341, %v341
    %v447 = vlaneseq
    %v448 = vshrl.u32 %v447, 7
    %v449 = vsub.s32 0, %v448
    %v450 = vrot.slane %v445, %v449
    %v452 = vpack.i.b16 %v345, %v345
    %v454 = vlaneseq
    %v455 = vshrl.u32 %v454, 7
    %v456 = vsub.s32 0, %v455
    %v457 = vrot.slane %v452, %v456
    %v458 = vsub.bf16 %v352, %v168
    %v459 = vsub.bf16 %v359, %v168
    %v460 = vsub.bf16 %v366, %v168
    %v461 = vsub.bf16 %v373, %v168
    %v462 = vsub.bf16 %v380, %v168
    %v463 = vsub.bf16 %v387, %v168
    %v464 = vsub.bf16 %v394, %v168
    %v465 = vsub.bf16 %v401, %v168
    %v466 = vsub.bf16 %v408, %v169
    %v467 = vsub.bf16 %v415, %v169
    %v468 = vsub.bf16 %v422, %v169
    %v469 = vsub.bf16 %v429, %v169
    %v470 = vsub.bf16 %v436, %v169
    %v471 = vsub.bf16 %v443, %v169
    %v472 = vsub.bf16 %v450, %v169
    %v473 = vsub.bf16 %v457, %v169
    %v474 = vand.u32 2147450879, %v458
    %v475 = vand.u32 2147450879, %v459
    %v476 = vand.u32 2147450879, %v460
    %v477 = vand.u32 2147450879, %v461
    %v478 = vand.u32 2147450879, %v462
    %v479 = vand.u32 2147450879, %v463
    %v480 = vand.u32 2147450879, %v464
    %v481 = vand.u32 2147450879, %v465
    %v482 = vand.u32 2147450879, %v466
    %v483 = vand.u32 2147450879, %v467
    %v484 = vand.u32 2147450879, %v468
    %v485 = vand.u32 2147450879, %v469
    %v486 = vand.u32 2147450879, %v470
    %v487 = vand.u32 2147450879, %v471
    %v488 = vand.u32 2147450879, %v472
    %v489 = vand.u32 2147450879, %v473
    %v491 = vlaneseq
    %v492 = vshrl.u32 %v491, 7
    %v493 = vsub.s32 0, %v492
    %v494 = vrot.slane %v197, %v493
    %v512 = vunpack.c.l.b16 %v474
    %v513 = vunpack.c.l.b16 %v475
    %v514 = vunpack.c.l.b16 %v476
    %v515 = vunpack.c.l.b16 %v477
    %v516 = vunpack.c.l.b16 %v478
    %v517 = vunpack.c.l.b16 %v479
    %v518 = vunpack.c.l.b16 %v480
    %v519 = vunpack.c.l.b16 %v481
    %v520 = vunpack.c.l.b16 %v482
    %v521 = vunpack.c.l.b16 %v483
    %v522 = vunpack.c.l.b16 %v484
    %v523 = vunpack.c.l.b16 %v485
    %v524 = vunpack.c.l.b16 %v486
    %v525 = vunpack.c.l.b16 %v487
    %v526 = vunpack.c.l.b16 %v488
    %v527 = vunpack.c.l.b16 %v489
    %v528 = vpack.c.b16 %v513, %v512
    %v529 = vpack.c.b16 %v515, %v514
    %v530 = vpack.c.b16 %v517, %v516
    %v531 = vpack.c.b16 %v519, %v518
    %v532 = vpack.c.b16 %v521, %v520
    %v533 = vpack.c.b16 %v523, %v522
    %v534 = vpack.c.b16 %v525, %v524
    %v535 = vpack.c.b16 %v527, %v526
    %v540 = vunpack.c.l.b16 %v170
    %v541 = vunpack.c.l.b16 %v171
    %v542 = vunpack.c.l.b16 %v172
    %v543 = vunpack.c.l.b16 %v173
    %v544 = vpack.c.b16 %v541, %v540
    %v545 = vpack.c.b16 %v543, %v542
    %vm548 = vcmask 261120
    %v550 = vsel %vm548, %v528, 0
    %v553 = vsel %vm548, %v529, 0
    %v556 = vsel %vm548, %v530, 0
    %v559 = vsel %vm548, %v531, 0
    %v562 = vsel %vm548, %v532, 0
    %v565 = vsel %vm548, %v533, 0
    %v568 = vsel %vm548, %v534, 0
    %v571 = vsel %vm548, %v535, 0
    %573 = vmatprep.subr.bf16.mxu0 0
    %574 = vmatpush1.bf16.msra.mxu0 %v544
    %575 = vmatprep.subr.bf16.mxu0 0
    %576 = vmatpush1.bf16.msra.mxu0 %v545
    %577 = vmatprep.subr.bf16.mxu0 0
    %578 = vmatpush1.bf16.msra.mxu0 0
    %579 = vmatprep.subr.bf16.mxu0 0
    %580 = vmatpush1.bf16.msra.mxu0 0
    %581 = vmatprep.subr.bf16.mxu0 0
    %582 = vmatpush1.bf16.msra.mxu0 0
    %583 = vmatprep.subr.bf16.mxu0 0
    %584 = vmatpush1.bf16.msra.mxu0 0
    %585 = vmatprep.subr.bf16.mxu0 0
    %586 = vmatpush1.bf16.msra.mxu0 0
    %587 = vmatprep.subr.bf16.mxu0 0
    %588 = vmatpush1.bf16.msra.mxu0 0
    %589 = vmatprep.subr.bf16.mxu0 0
    %590 = vmatpush1.bf16.msra.mxu0 0
    %591 = vmatprep.subr.bf16.mxu0 0
    %592 = vmatpush1.bf16.msra.mxu0 0
    %593 = vmatprep.subr.bf16.mxu0 0
    %594 = vmatpush1.bf16.msra.mxu0 0
    %595 = vmatprep.subr.bf16.mxu0 0
    %596 = vmatpush1.bf16.msra.mxu0 0
    %597 = vmatprep.subr.bf16.mxu0 0
    %598 = vmatpush1.bf16.msra.mxu0 0
    %599 = vmatprep.subr.bf16.mxu0 0
    %600 = vmatpush1.bf16.msra.mxu0 0
    %601 = vmatprep.subr.bf16.mxu0 0
    %602 = vmatpush1.bf16.msra.mxu0 0
    %603 = vmatprep.subr.bf16.mxu0 0
    %604 = vmatpush1.bf16.msra.mxu0 0
    %605 = vmatprep.mubr.bf16.mxu0 0
    %606 = vmatmul.mubr.bf16.gmra.mrb[0].mxu0 %v550
    %v607 = vpop.f32.mrb[0].mxu0
    %v608 = vadd.f32 %v494, %v607
    %v609 = vpop.f32.mrb[0].mxu0
    %v610 = vpop.f32.mrb[0].mxu0
    %v611 = vadd.f32 %v494, %v610
    %v612 = vpop.f32.mrb[0].mxu0
    %613 = vmatprep.mubr.bf16.mxu0 0
    %614 = vmatmul.mubr.bf16.gmra.mrb[0].mxu0 %v553
    %v615 = vpop.f32.mrb[0].mxu0
    %v616 = vadd.f32 %v494, %v615
    %v617 = vpop.f32.mrb[0].mxu0
    %v618 = vpop.f32.mrb[0].mxu0
    %v619 = vadd.f32 %v494, %v618
    %v620 = vpop.f32.mrb[0].mxu0
    %621 = vmatprep.mubr.bf16.mxu0 0
    %622 = vmatmul.mubr.bf16.gmra.mrb[0].mxu0 %v556
    %v623 = vpop.f32.mrb[0].mxu0
    %v624 = vadd.f32 %v494, %v623
    %v625 = vpop.f32.mrb[0].mxu0
    %v626 = vpop.f32.mrb[0].mxu0
    %v627 = vadd.f32 %v494, %v626
    %v628 = vpop.f32.mrb[0].mxu0
    %629 = vmatprep.mubr.bf16.mxu0 0
    %630 = vmatmul.mubr.bf16.gmra.mrb[0].mxu0 %v559
    %v631 = vpop.f32.mrb[0].mxu0
    %v632 = vadd.f32 %v494, %v631
    %v633 = vpop.f32.mrb[0].mxu0
    %v634 = vpop.f32.mrb[0].mxu0
    %v635 = vadd.f32 %v494, %v634
    %v636 = vpop.f32.mrb[0].mxu0
    %637 = vmatprep.mubr.bf16.mxu0 0
    %638 = vmatmul.mubr.bf16.gmra.mrb[0].mxu0 %v562
    %v639 = vpop.f32.mrb[0].mxu0
    %v640 = vadd.f32 %v494, %v639
    %v641 = vpop.f32.mrb[0].mxu0
    %v642 = vpop.f32.mrb[0].mxu0
    %v643 = vadd.f32 %v494, %v642
    %v644 = vpop.f32.mrb[0].mxu0
    %645 = vmatprep.mubr.bf16.mxu0 0
    %646 = vmatmul.mubr.bf16.gmra.mrb[0].mxu0 %v565
    %v647 = vpop.f32.mrb[0].mxu0
    %v648 = vadd.f32 %v494, %v647
    %v649 = vpop.f32.mrb[0].mxu0
    %v650 = vpop.f32.mrb[0].mxu0
    %v651 = vadd.f32 %v494, %v650
    %v652 = vpop.f32.mrb[0].mxu0
    %653 = vmatprep.mubr.bf16.mxu0 0
    %654 = vmatmul.mubr.bf16.gmra.mrb[0].mxu0 %v568
    %v655 = vpop.f32.mrb[0].mxu0
    %v656 = vadd.f32 %v494, %v655
    %v657 = vpop.f32.mrb[0].mxu0
    %v658 = vpop.f32.mrb[0].mxu0
    %v659 = vadd.f32 %v494, %v658
    %v660 = vpop.f32.mrb[0].mxu0
    %661 = vmatprep.mubr.bf16.mxu0 0
    %662 = vmatmul.mubr.bf16.gmra.mrb[0].mxu0 %v571
    %v663 = vpop.f32.mrb[0].mxu0
    %v664 = vadd.f32 %v494, %v663
    %v665 = vpop.f32.mrb[0].mxu0
    %v666 = vpop.f32.mrb[0].mxu0
    %v667 = vadd.f32 %v494, %v666
    %v668 = vpop.f32.mrb[0].mxu0
    %669 = vdwg.mxu0
    %v670 = vmul.f32 %v608, 0.01
    %v671 = vmul.f32 %v611, 0.01
    %v672 = vmul.f32 %v616, 0.01
    %v673 = vmul.f32 %v619, 0.01
    %v674 = vmul.f32 %v624, 0.01
    %v675 = vmul.f32 %v627, 0.01
    %v676 = vmul.f32 %v632, 0.01
    %v677 = vmul.f32 %v635, 0.01
    %v678 = vmul.f32 %v640, 0.01
    %v679 = vmul.f32 %v643, 0.01
    %v680 = vmul.f32 %v648, 0.01
    %v681 = vmul.f32 %v651, 0.01
    %v682 = vmul.f32 %v656, 0.01
    %v683 = vmul.f32 %v659, 0.01
    %v684 = vmul.f32 %v664, 0.01
    %v685 = vmul.f32 %v667, 0.01
    %v686 = vmax.f32 %v608, %v670
    %v687 = vmax.f32 %v611, %v671
    %v688 = vmax.f32 %v616, %v672
    %v689 = vmax.f32 %v619, %v673
    %v690 = vmax.f32 %v624, %v674
    %v691 = vmax.f32 %v627, %v675
    %v692 = vmax.f32 %v632, %v676
    %v693 = vmax.f32 %v635, %v677
    %v694 = vmax.f32 %v640, %v678
    %v695 = vmax.f32 %v643, %v679
    %v696 = vmax.f32 %v648, %v680
    %v697 = vmax.f32 %v651, %v681
    %v698 = vmax.f32 %v656, %v682
    %v699 = vmax.f32 %v659, %v683
    %v700 = vmax.f32 %v664, %v684
    %v701 = vmax.f32 %v667, %v685
    %v702 = vpack.c.bf16 %v687, %v686
    %v703 = vpack.c.bf16 %v689, %v688
    %v704 = vpack.c.bf16 %v691, %v690
    %v705 = vpack.c.bf16 %v693, %v692
    %v706 = vpack.c.bf16 %v695, %v694
    %v707 = vpack.c.bf16 %v697, %v696
    %v708 = vpack.c.bf16 %v699, %v698
    %v709 = vpack.c.bf16 %v701, %v700
    %v711 = vlaneseq
    %v712 = vshrl.u32 %v711, 7
    %v713 = vsub.s32 0, %v712
    %v714 = vrot.slane %v198, %v713
    %v724 = vunpack.c.l.b16 %v174
    %v725 = vunpack.c.l.b16 %v175
    %v726 = vunpack.c.l.b16 %v176
    %v727 = vunpack.c.l.b16 %v177
    %v728 = vunpack.c.l.b16 %v178
    %v729 = vunpack.c.l.b16 %v179
    %v730 = vunpack.c.l.b16 %v180
    %v731 = vunpack.c.l.b16 %v181
    %v732 = vpack.c.b16 %v725, %v724
    %v733 = vpack.c.b16 %v727, %v726
    %v734 = vpack.c.b16 %v729, %v728
    %v735 = vpack.c.b16 %v731, %v730
    %vm740 = vcmask 523264
    %v742 = vsel %vm740, %v702, 0
    %v745 = vsel %vm740, %v703, 0
    %v748 = vsel %vm740, %v704, 0
    %v751 = vsel %vm740, %v705, 0
    %v754 = vsel %vm740, %v706, 0
    %v757 = vsel %vm740, %v707, 0
    %v760 = vsel %vm740, %v708, 0
    %v763 = vsel %vm740, %v709, 0
    %765 = vmatprep.subr.bf16.mxu0 0
    %766 = vmatpush1.bf16.msra.mxu0 %v732
    %767 = vmatprep.subr.bf16.mxu0 0
    %768 = vmatpush1.bf16.msra.mxu0 %v733
    %769 = vmatprep.subr.bf16.mxu0 0
    %770 = vmatpush1.bf16.msra.mxu0 %v734
    %771 = vmatprep.subr.bf16.mxu0 0
    %772 = vmatpush1.bf16.msra.mxu0 %v735
    %773 = vmatprep.subr.bf16.mxu0 0
    %774 = vmatpush1.bf16.msra.mxu0 0
    %775 = vmatprep.subr.bf16.mxu0 0
    %776 = vmatpush1.bf16.msra.mxu0 0
    %777 = vmatprep.subr.bf16.mxu0 0
    %778 = vmatpush1.bf16.msra.mxu0 0
    %779 = vmatprep.subr.bf16.mxu0 0
    %780 = vmatpush1.bf16.msra.mxu0 0
    %781 = vmatprep.subr.bf16.mxu0 0
    %782 = vmatpush1.bf16.msra.mxu0 0
    %783 = vmatprep.subr.bf16.mxu0 0
    %784 = vmatpush1.bf16.msra.mxu0 0
    %785 = vmatprep.subr.bf16.mxu0 0
    %786 = vmatpush1.bf16.msra.mxu0 0
    %787 = vmatprep.subr.bf16.mxu0 0
    %788 = vmatpush1.bf16.msra.mxu0 0
    %789 = vmatprep.subr.bf16.mxu0 0
    %790 = vmatpush1.bf16.msra.mxu0 0
    %791 = vmatprep.subr.bf16.mxu0 0
    %792 = vmatpush1.bf16.msra.mxu0 0
    %793 = vmatprep.subr.bf16.mxu0 0
    %794 = vmatpush1.bf16.msra.mxu0 0
    %795 = vmatprep.subr.bf16.mxu0 0
    %796 = vmatpush1.bf16.msra.mxu0 0
    %797 = vmatprep.mubr.bf16.mxu0 0
    %798 = vmatmul.mubr.bf16.gmra.mrb[0].mxu0 %v742
    %v799 = vpop.f32.mrb[0].mxu0
    %v800 = vadd.f32 %v714, %v799
    %v801 = vpop.f32.mrb[0].mxu0
    %v802 = vpop.f32.mrb[0].mxu0
    %v803 = vadd.f32 %v714, %v802
    %v804 = vpop.f32.mrb[0].mxu0
    %805 = vmatprep.mubr.bf16.mxu0 0
    %806 = vmatmul.mubr.bf16.gmra.mrb[0].mxu0 %v745
    %v807 = vpop.f32.mrb[0].mxu0
    %v808 = vadd.f32 %v714, %v807
    %v809 = vpop.f32.mrb[0].mxu0
    %v810 = vpop.f32.mrb[0].mxu0
    %v811 = vadd.f32 %v714, %v810
    %v812 = vpop.f32.mrb[0].mxu0
    %813 = vmatprep.mubr.bf16.mxu0 0
    %814 = vmatmul.mubr.bf16.gmra.mrb[0].mxu0 %v748
    %v815 = vpop.f32.mrb[0].mxu0
    %v816 = vadd.f32 %v714, %v815
    %v817 = vpop.f32.mrb[0].mxu0
    %v818 = vpop.f32.mrb[0].mxu0
    %v819 = vadd.f32 %v714, %v818
    %v820 = vpop.f32.mrb[0].mxu0
    %821 = vmatprep.mubr.bf16.mxu0 0
    %822 = vmatmul.mubr.bf16.gmra.mrb[0].mxu0 %v751
    %v823 = vpop.f32.mrb[0].mxu0
    %v824 = vadd.f32 %v714, %v823
    %v825 = vpop.f32.mrb[0].mxu0
    %v826 = vpop.f32.mrb[0].mxu0
    %v827 = vadd.f32 %v714, %v826
    %v828 = vpop.f32.mrb[0].mxu0
    %829 = vmatprep.mubr.bf16.mxu0 0
    %830 = vmatmul.mubr.bf16.gmra.mrb[0].mxu0 %v754
    %v831 = vpop.f32.mrb[0].mxu0
    %v832 = vadd.f32 %v714, %v831
    %v833 = vpop.f32.mrb[0].mxu0
    %v834 = vpop.f32.mrb[0].mxu0
    %v835 = vadd.f32 %v714, %v834
    %v836 = vpop.f32.mrb[0].mxu0
    %837 = vmatprep.mubr.bf16.mxu0 0
    %838 = vmatmul.mubr.bf16.gmra.mrb[0].mxu0 %v757
    %v839 = vpop.f32.mrb[0].mxu0
    %v840 = vadd.f32 %v714, %v839
    %v841 = vpop.f32.mrb[0].mxu0
    %v842 = vpop.f32.mrb[0].mxu0
    %v843 = vadd.f32 %v714, %v842
    %v844 = vpop.f32.mrb[0].mxu0
    %845 = vmatprep.mubr.bf16.mxu0 0
    %846 = vmatmul.mubr.bf16.gmra.mrb[0].mxu0 %v760
    %v847 = vpop.f32.mrb[0].mxu0
    %v848 = vadd.f32 %v714, %v847
    %v849 = vpop.f32.mrb[0].mxu0
    %v850 = vpop.f32.mrb[0].mxu0
    %v851 = vadd.f32 %v714, %v850
    %v852 = vpop.f32.mrb[0].mxu0
    %853 = vmatprep.mubr.bf16.mxu0 0
    %854 = vmatmul.mubr.bf16.gmra.mrb[0].mxu0 %v763
    %v855 = vpop.f32.mrb[0].mxu0
    %v856 = vadd.f32 %v714, %v855
    %v857 = vpop.f32.mrb[0].mxu0
    %v858 = vpop.f32.mrb[0].mxu0
    %v859 = vadd.f32 %v714, %v858
    %v860 = vpop.f32.mrb[0].mxu0
    %861 = vdwg.mxu0
    %v862 = vmul.f32 %v800, 0.01
    %v863 = vmul.f32 %v803, 0.01
    %v864 = vmul.f32 %v808, 0.01
    %v865 = vmul.f32 %v811, 0.01
    %v866 = vmul.f32 %v816, 0.01
    %v867 = vmul.f32 %v819, 0.01
    %v868 = vmul.f32 %v824, 0.01
    %v869 = vmul.f32 %v827, 0.01
    %v870 = vmul.f32 %v832, 0.01
    %v871 = vmul.f32 %v835, 0.01
    %v872 = vmul.f32 %v840, 0.01
    %v873 = vmul.f32 %v843, 0.01
    %v874 = vmul.f32 %v848, 0.01
    %v875 = vmul.f32 %v851, 0.01
    %v876 = vmul.f32 %v856, 0.01
    %v877 = vmul.f32 %v859, 0.01
    %v878 = vmax.f32 %v800, %v862
    %v879 = vmax.f32 %v803, %v863
    %v880 = vmax.f32 %v808, %v864
    %v881 = vmax.f32 %v811, %v865
    %v882 = vmax.f32 %v816, %v866
    %v883 = vmax.f32 %v819, %v867
    %v884 = vmax.f32 %v824, %v868
    %v885 = vmax.f32 %v827, %v869
    %v886 = vmax.f32 %v832, %v870
    %v887 = vmax.f32 %v835, %v871
    %v888 = vmax.f32 %v840, %v872
    %v889 = vmax.f32 %v843, %v873
    %v890 = vmax.f32 %v848, %v874
    %v891 = vmax.f32 %v851, %v875
    %v892 = vmax.f32 %v856, %v876
    %v893 = vmax.f32 %v859, %v877
    %v894 = vpack.c.bf16 %v879, %v878
    %v895 = vpack.c.bf16 %v881, %v880
    %v896 = vpack.c.bf16 %v883, %v882
    %v897 = vpack.c.bf16 %v885, %v884
    %v898 = vpack.c.bf16 %v887, %v886
    %v899 = vpack.c.bf16 %v889, %v888
    %v900 = vpack.c.bf16 %v891, %v890
    %v901 = vpack.c.bf16 %v893, %v892
    %v903 = vlaneseq
    %v904 = vshrl.u32 %v903, 7
    %v905 = vsub.s32 0, %v904
    %v906 = vrot.slane %v199, %v905
    %v916 = vunpack.c.l.b16 %v182
    %v917 = vunpack.c.l.b16 %v183
    %v918 = vunpack.c.l.b16 %v184
    %v919 = vunpack.c.l.b16 %v185
    %v920 = vunpack.c.l.b16 %v186
    %v921 = vunpack.c.l.b16 %v187
    %v922 = vunpack.c.l.b16 %v188
    %v923 = vunpack.c.l.b16 %v189
    %v924 = vpack.c.b16 %v917, %v916
    %v925 = vpack.c.b16 %v919, %v918
    %v926 = vpack.c.b16 %v921, %v920
    %v927 = vpack.c.b16 %v923, %v922
    %v933 = vsel %vm740, %v894, 0
    %v936 = vsel %vm740, %v895, 0
    %v939 = vsel %vm740, %v896, 0
    %v942 = vsel %vm740, %v897, 0
    %v945 = vsel %vm740, %v898, 0
    %v948 = vsel %vm740, %v899, 0
    %v951 = vsel %vm740, %v900, 0
    %v954 = vsel %vm740, %v901, 0
    %956 = vmatprep.subr.bf16.mxu0 0
    %957 = vmatpush1.bf16.msra.mxu0 %v924
    %958 = vmatprep.subr.bf16.mxu0 0
    %959 = vmatpush1.bf16.msra.mxu0 %v925
    %960 = vmatprep.subr.bf16.mxu0 0
    %961 = vmatpush1.bf16.msra.mxu0 %v926
    %962 = vmatprep.subr.bf16.mxu0 0
    %963 = vmatpush1.bf16.msra.mxu0 %v927
    %964 = vmatprep.subr.bf16.mxu0 0
    %965 = vmatpush1.bf16.msra.mxu0 0
    %966 = vmatprep.subr.bf16.mxu0 0
    %967 = vmatpush1.bf16.msra.mxu0 0
    %968 = vmatprep.subr.bf16.mxu0 0
    %969 = vmatpush1.bf16.msra.mxu0 0
    %970 = vmatprep.subr.bf16.mxu0 0
    %971 = vmatpush1.bf16.msra.mxu0 0
    %972 = vmatprep.subr.bf16.mxu0 0
    %973 = vmatpush1.bf16.msra.mxu0 0
    %974 = vmatprep.subr.bf16.mxu0 0
    %975 = vmatpush1.bf16.msra.mxu0 0
    %976 = vmatprep.subr.bf16.mxu0 0
    %977 = vmatpush1.bf16.msra.mxu0 0
    %978 = vmatprep.subr.bf16.mxu0 0
    %979 = vmatpush1.bf16.msra.mxu0 0
    %980 = vmatprep.subr.bf16.mxu0 0
    %981 = vmatpush1.bf16.msra.mxu0 0
    %982 = vmatprep.subr.bf16.mxu0 0
    %983 = vmatpush1.bf16.msra.mxu0 0
    %984 = vmatprep.subr.bf16.mxu0 0
    %985 = vmatpush1.bf16.msra.mxu0 0
    %986 = vmatprep.subr.bf16.mxu0 0
    %987 = vmatpush1.bf16.msra.mxu0 0
    %988 = vmatprep.mubr.bf16.mxu0 0
    %989 = vmatmul.mubr.bf16.gmra.mrb[0].mxu0 %v933
    %v990 = vpop.f32.mrb[0].mxu0
    %v991 = vadd.f32 %v906, %v990
    %v992 = vpop.f32.mrb[0].mxu0
    %v993 = vpop.f32.mrb[0].mxu0
    %v994 = vadd.f32 %v906, %v993
    %v995 = vpop.f32.mrb[0].mxu0
    %996 = vmatprep.mubr.bf16.mxu0 0
    %997 = vmatmul.mubr.bf16.gmra.mrb[0].mxu0 %v936
    %v998 = vpop.f32.mrb[0].mxu0
    %v999 = vadd.f32 %v906, %v998
    %v1000 = vpop.f32.mrb[0].mxu0
    %v1001 = vpop.f32.mrb[0].mxu0
    %v1002 = vadd.f32 %v906, %v1001
    %v1003 = vpop.f32.mrb[0].mxu0
    %1004 = vmatprep.mubr.bf16.mxu0 0
    %1005 = vmatmul.mubr.bf16.gmra.mrb[0].mxu0 %v939
    %v1006 = vpop.f32.mrb[0].mxu0
    %v1007 = vadd.f32 %v906, %v1006
    %v1008 = vpop.f32.mrb[0].mxu0
    %v1009 = vpop.f32.mrb[0].mxu0
    %v1010 = vadd.f32 %v906, %v1009
    %v1011 = vpop.f32.mrb[0].mxu0
    %1012 = vmatprep.mubr.bf16.mxu0 0
    %1013 = vmatmul.mubr.bf16.gmra.mrb[0].mxu0 %v942
    %v1014 = vpop.f32.mrb[0].mxu0
    %v1015 = vadd.f32 %v906, %v1014
    %v1016 = vpop.f32.mrb[0].mxu0
    %v1017 = vpop.f32.mrb[0].mxu0
    %v1018 = vadd.f32 %v906, %v1017
    %v1019 = vpop.f32.mrb[0].mxu0
    %1020 = vmatprep.mubr.bf16.mxu0 0
    %1021 = vmatmul.mubr.bf16.gmra.mrb[0].mxu0 %v945
    %v1022 = vpop.f32.mrb[0].mxu0
    %v1023 = vadd.f32 %v906, %v1022
    %v1024 = vpop.f32.mrb[0].mxu0
    %v1025 = vpop.f32.mrb[0].mxu0
    %v1026 = vadd.f32 %v906, %v1025
    %v1027 = vpop.f32.mrb[0].mxu0
    %1028 = vmatprep.mubr.bf16.mxu0 0
    %1029 = vmatmul.mubr.bf16.gmra.mrb[0].mxu0 %v948
    %v1030 = vpop.f32.mrb[0].mxu0
    %v1031 = vadd.f32 %v906, %v1030
    %v1032 = vpop.f32.mrb[0].mxu0
    %v1033 = vpop.f32.mrb[0].mxu0
    %v1034 = vadd.f32 %v906, %v1033
    %v1035 = vpop.f32.mrb[0].mxu0
    %1036 = vmatprep.mubr.bf16.mxu0 0
    %1037 = vmatmul.mubr.bf16.gmra.mrb[0].mxu0 %v951
    %v1038 = vpop.f32.mrb[0].mxu0
    %v1039 = vadd.f32 %v906, %v1038
    %v1040 = vpop.f32.mrb[0].mxu0
    %v1041 = vpop.f32.mrb[0].mxu0
    %v1042 = vadd.f32 %v906, %v1041
    %v1043 = vpop.f32.mrb[0].mxu0
    %1044 = vmatprep.mubr.bf16.mxu0 0
    %1045 = vmatmul.mubr.bf16.gmra.mrb[0].mxu0 %v954
    %v1046 = vpop.f32.mrb[0].mxu0
    %v1047 = vadd.f32 %v906, %v1046
    %v1048 = vpop.f32.mrb[0].mxu0
    %v1049 = vpop.f32.mrb[0].mxu0
    %v1050 = vadd.f32 %v906, %v1049
    %v1051 = vpop.f32.mrb[0].mxu0
    %1052 = vdwg.mxu0
    %v1053 = vmul.f32 %v991, 0.01
    %v1054 = vmul.f32 %v994, 0.01
    %v1055 = vmul.f32 %v999, 0.01
    %v1056 = vmul.f32 %v1002, 0.01
    %v1057 = vmul.f32 %v1007, 0.01
    %v1058 = vmul.f32 %v1010, 0.01
    %v1059 = vmul.f32 %v1015, 0.01
    %v1060 = vmul.f32 %v1018, 0.01
    %v1061 = vmul.f32 %v1023, 0.01
    %v1062 = vmul.f32 %v1026, 0.01
    %v1063 = vmul.f32 %v1031, 0.01
    %v1064 = vmul.f32 %v1034, 0.01
    %v1065 = vmul.f32 %v1039, 0.01
    %v1066 = vmul.f32 %v1042, 0.01
    %v1067 = vmul.f32 %v1047, 0.01
    %v1068 = vmul.f32 %v1050, 0.01
    %v1069 = vmax.f32 %v991, %v1053
    %v1070 = vmax.f32 %v994, %v1054
    %v1071 = vmax.f32 %v999, %v1055
    %v1072 = vmax.f32 %v1002, %v1056
    %v1073 = vmax.f32 %v1007, %v1057
    %v1074 = vmax.f32 %v1010, %v1058
    %v1075 = vmax.f32 %v1015, %v1059
    %v1076 = vmax.f32 %v1018, %v1060
    %v1077 = vmax.f32 %v1023, %v1061
    %v1078 = vmax.f32 %v1026, %v1062
    %v1079 = vmax.f32 %v1031, %v1063
    %v1080 = vmax.f32 %v1034, %v1064
    %v1081 = vmax.f32 %v1039, %v1065
    %v1082 = vmax.f32 %v1042, %v1066
    %v1083 = vmax.f32 %v1047, %v1067
    %v1084 = vmax.f32 %v1050, %v1068
    %v1085 = vpack.c.bf16 %v1070, %v1069
    %v1086 = vpack.c.bf16 %v1072, %v1071
    %v1087 = vpack.c.bf16 %v1074, %v1073
    %v1088 = vpack.c.bf16 %v1076, %v1075
    %v1089 = vpack.c.bf16 %v1078, %v1077
    %v1090 = vpack.c.bf16 %v1080, %v1079
    %v1091 = vpack.c.bf16 %v1082, %v1081
    %v1092 = vpack.c.bf16 %v1084, %v1083
    %v1094 = vlaneseq
    %v1095 = vshrl.u32 %v1094, 7
    %v1096 = vsub.s32 0, %v1095
    %v1097 = vrot.slane %v196, %v1096
    %v1103 = vunpack.c.l.b16 %v190
    %v1104 = vunpack.c.l.b16 %v191
    %v1105 = vunpack.c.l.b16 %v192
    %v1106 = vunpack.c.l.b16 %v193
    %v1107 = vpack.c.b16 %v1104, %v1103
    %v1108 = vpack.c.b16 %v1106, %v1105
    %v1112 = vsel %vm548, %v1085, 0
    %v1115 = vsel %vm548, %v1086, 0
    %v1118 = vsel %vm548, %v1087, 0
    %v1121 = vsel %vm548, %v1088, 0
    %v1124 = vsel %vm548, %v1089, 0
    %v1127 = vsel %vm548, %v1090, 0
    %v1130 = vsel %vm548, %v1091, 0
    %v1133 = vsel %vm548, %v1092, 0
    %1135 = vmatprep.subr.bf16.mxu0 0
    %1136 = vmatpush1.bf16.msra.mxu0 %v1107
    %1137 = vmatprep.subr.bf16.mxu0 0
    %1138 = vmatpush1.bf16.msra.mxu0 %v1108
    %1139 = vmatprep.subr.bf16.mxu0 0
    %1140 = vmatpush1.bf16.msra.mxu0 0
    %1141 = vmatprep.subr.bf16.mxu0 0
    %1142 = vmatpush1.bf16.msra.mxu0 0
    %1143 = vmatprep.subr.bf16.mxu0 0
    %1144 = vmatpush1.bf16.msra.mxu0 0
    %1145 = vmatprep.subr.bf16.mxu0 0
    %1146 = vmatpush1.bf16.msra.mxu0 0
    %1147 = vmatprep.subr.bf16.mxu0 0
    %1148 = vmatpush1.bf16.msra.mxu0 0
    %1149 = vmatprep.subr.bf16.mxu0 0
    %1150 = vmatpush1.bf16.msra.mxu0 0
    %1151 = vmatprep.subr.bf16.mxu0 0
    %1152 = vmatpush1.bf16.msra.mxu0 0
    %1153 = vmatprep.subr.bf16.mxu0 0
    %1154 = vmatpush1.bf16.msra.mxu0 0
    %1155 = vmatprep.subr.bf16.mxu0 0
    %1156 = vmatpush1.bf16.msra.mxu0 0
    %1157 = vmatprep.subr.bf16.mxu0 0
    %1158 = vmatpush1.bf16.msra.mxu0 0
    %1159 = vmatprep.subr.bf16.mxu0 0
    %1160 = vmatpush1.bf16.msra.mxu0 0
    %1161 = vmatprep.subr.bf16.mxu0 0
    %1162 = vmatpush1.bf16.msra.mxu0 0
    %1163 = vmatprep.subr.bf16.mxu0 0
    %1164 = vmatpush1.bf16.msra.mxu0 0
    %1165 = vmatprep.subr.bf16.mxu0 0
    %1166 = vmatpush1.bf16.msra.mxu0 0
    %1167 = vmatprep.mubr.bf16.mxu0 0
    %1168 = vmatmul.mubr.bf16.gmra.mrb[0].mxu0 %v1112
    %v1169 = vpop.f32.mrb[0].mxu0
    %v1170 = vadd.f32 %v1097, %v1169
    %v1171 = vpop.f32.mrb[0].mxu0
    %v1172 = vpop.f32.mrb[0].mxu0
    %v1173 = vadd.f32 %v1097, %v1172
    %v1174 = vpop.f32.mrb[0].mxu0
    %1175 = vmatprep.mubr.bf16.mxu0 0
    %1176 = vmatmul.mubr.bf16.gmra.mrb[0].mxu0 %v1115
    %v1177 = vpop.f32.mrb[0].mxu0
    %v1178 = vadd.f32 %v1097, %v1177
    %v1179 = vpop.f32.mrb[0].mxu0
    %v1180 = vpop.f32.mrb[0].mxu0
    %v1181 = vadd.f32 %v1097, %v1180
    %v1182 = vpop.f32.mrb[0].mxu0
    %1183 = vmatprep.mubr.bf16.mxu0 0
    %1184 = vmatmul.mubr.bf16.gmra.mrb[0].mxu0 %v1118
    %v1185 = vpop.f32.mrb[0].mxu0
    %v1186 = vadd.f32 %v1097, %v1185
    %v1187 = vpop.f32.mrb[0].mxu0
    %v1188 = vpop.f32.mrb[0].mxu0
    %v1189 = vadd.f32 %v1097, %v1188
    %v1190 = vpop.f32.mrb[0].mxu0
    %1191 = vmatprep.mubr.bf16.mxu0 0
    %1192 = vmatmul.mubr.bf16.gmra.mrb[0].mxu0 %v1121
    %v1193 = vpop.f32.mrb[0].mxu0
    %v1194 = vadd.f32 %v1097, %v1193
    %v1195 = vpop.f32.mrb[0].mxu0
    %v1196 = vpop.f32.mrb[0].mxu0
    %v1197 = vadd.f32 %v1097, %v1196
    %v1198 = vpop.f32.mrb[0].mxu0
    %1199 = vmatprep.mubr.bf16.mxu0 0
    %1200 = vmatmul.mubr.bf16.gmra.mrb[0].mxu0 %v1124
    %v1201 = vpop.f32.mrb[0].mxu0
    %v1202 = vadd.f32 %v1097, %v1201
    %v1203 = vpop.f32.mrb[0].mxu0
    %v1204 = vpop.f32.mrb[0].mxu0
    %v1205 = vadd.f32 %v1097, %v1204
    %v1206 = vpop.f32.mrb[0].mxu0
    %1207 = vmatprep.mubr.bf16.mxu0 0
    %1208 = vmatmul.mubr.bf16.gmra.mrb[0].mxu0 %v1127
    %v1209 = vpop.f32.mrb[0].mxu0
    %v1210 = vadd.f32 %v1097, %v1209
    %v1211 = vpop.f32.mrb[0].mxu0
    %v1212 = vpop.f32.mrb[0].mxu0
    %v1213 = vadd.f32 %v1097, %v1212
    %v1214 = vpop.f32.mrb[0].mxu0
    %1215 = vmatprep.mubr.bf16.mxu0 0
    %1216 = vmatmul.mubr.bf16.gmra.mrb[0].mxu0 %v1130
    %v1217 = vpop.f32.mrb[0].mxu0
    %v1218 = vadd.f32 %v1097, %v1217
    %v1219 = vpop.f32.mrb[0].mxu0
    %v1220 = vpop.f32.mrb[0].mxu0
    %v1221 = vadd.f32 %v1097, %v1220
    %v1222 = vpop.f32.mrb[0].mxu0
    %1223 = vmatprep.mubr.bf16.mxu0 0
    %1224 = vmatmul.mubr.bf16.gmra.mrb[0].mxu0 %v1133
    %v1225 = vpop.f32.mrb[0].mxu0
    %v1226 = vadd.f32 %v1097, %v1225
    %v1227 = vpop.f32.mrb[0].mxu0
    %v1228 = vpop.f32.mrb[0].mxu0
    %v1229 = vadd.f32 %v1097, %v1228
    %v1230 = vpop.f32.mrb[0].mxu0
    %1231 = vdwg.mxu0
    %v1232 = vmul.f32 %v1170, 0.01
    %v1233 = vmul.f32 %v1173, 0.01
    %v1234 = vmul.f32 %v1178, 0.01
    %v1235 = vmul.f32 %v1181, 0.01
    %v1236 = vmul.f32 %v1186, 0.01
    %v1237 = vmul.f32 %v1189, 0.01
    %v1238 = vmul.f32 %v1194, 0.01
    %v1239 = vmul.f32 %v1197, 0.01
    %v1240 = vmul.f32 %v1202, 0.01
    %v1241 = vmul.f32 %v1205, 0.01
    %v1242 = vmul.f32 %v1210, 0.01
    %v1243 = vmul.f32 %v1213, 0.01
    %v1244 = vmul.f32 %v1218, 0.01
    %v1245 = vmul.f32 %v1221, 0.01
    %v1246 = vmul.f32 %v1226, 0.01
    %v1247 = vmul.f32 %v1229, 0.01
    %v1248 = vmax.f32 %v1170, %v1232
    %v1249 = vmax.f32 %v1173, %v1233
    %v1250 = vmax.f32 %v1178, %v1234
    %v1251 = vmax.f32 %v1181, %v1235
    %v1252 = vmax.f32 %v1186, %v1236
    %v1253 = vmax.f32 %v1189, %v1237
    %v1254 = vmax.f32 %v1194, %v1238
    %v1255 = vmax.f32 %v1197, %v1239
    %v1256 = vmax.f32 %v1202, %v1240
    %v1257 = vmax.f32 %v1205, %v1241
    %v1258 = vmax.f32 %v1210, %v1242
    %v1259 = vmax.f32 %v1213, %v1243
    %v1260 = vmax.f32 %v1218, %v1244
    %v1261 = vmax.f32 %v1221, %v1245
    %v1262 = vmax.f32 %v1226, %v1246
    %v1263 = vmax.f32 %v1229, %v1247
    %v1265 = vlaneseq
    %v1266 = vshrl.u32 %v1265, 7
    %v1267 = vsub.s32 0, %v1266
    %v1268 = vrot.slane %v194, %v1267
    %v1270 = vmul.f32 %v1248, %v1268
    %v1271 = vmul.f32 %v1249, %v1268
    %v1272 = vmul.f32 %v1250, %v1268
    %v1273 = vmul.f32 %v1251, %v1268
    %v1274 = vmul.f32 %v1252, %v1268
    %v1275 = vmul.f32 %v1253, %v1268
    %v1276 = vmul.f32 %v1254, %v1268
    %v1277 = vmul.f32 %v1255, %v1268
    %v1278 = vmul.f32 %v1256, %v1268
    %v1279 = vmul.f32 %v1257, %v1268
    %v1280 = vmul.f32 %v1258, %v1268
    %v1281 = vmul.f32 %v1259, %v1268
    %v1282 = vmul.f32 %v1260, %v1268
    %v1283 = vmul.f32 %v1261, %v1268
    %v1284 = vmul.f32 %v1262, %v1268
    %v1285 = vmul.f32 %v1263, %v1268
    %v1286 = vsel %vm548, %v1270, 0.0
    %1287 = vadd.xlane.f32.xlu0 %v1286
    %v1288 = vpop.xlane.xlu0 %1287
    %v1289 = vsel %vm548, %v1271, 0.0
    %1290 = vadd.xlane.f32.xlu0 %v1289
    %v1291 = vpop.xlane.xlu0 %1290
    %v1292 = vsel %vm548, %v1272, 0.0
    %1293 = vadd.xlane.f32.xlu0 %v1292
    %v1294 = vpop.xlane.xlu0 %1293
    %v1295 = vsel %vm548, %v1273, 0.0
    %1296 = vadd.xlane.f32.xlu0 %v1295
    %v1297 = vpop.xlane.xlu0 %1296
    %v1298 = vsel %vm548, %v1274, 0.0
    %1299 = vadd.xlane.f32.xlu0 %v1298
    %v1300 = vpop.xlane.xlu0 %1299
    %v1301 = vsel %vm548, %v1275, 0.0
    %1302 = vadd.xlane.f32.xlu0 %v1301
    %v1303 = vpop.xlane.xlu0 %1302
    %v1304 = vsel %vm548, %v1276, 0.0
    %1305 = vadd.xlane.f32.xlu0 %v1304
    %v1306 = vpop.xlane.xlu0 %1305
    %v1307 = vsel %vm548, %v1277, 0.0
    %1308 = vadd.xlane.f32.xlu0 %v1307
    %v1309 = vpop.xlane.xlu0 %1308
    %v1310 = vsel %vm548, %v1278, 0.0
    %1311 = vadd.xlane.f32.xlu0 %v1310
    %v1312 = vpop.xlane.xlu0 %1311
    %v1313 = vsel %vm548, %v1279, 0.0
    %1314 = vadd.xlane.f32.xlu0 %v1313
    %v1315 = vpop.xlane.xlu0 %1314
    %v1316 = vsel %vm548, %v1280, 0.0
    %1317 = vadd.xlane.f32.xlu0 %v1316
    %v1318 = vpop.xlane.xlu0 %1317
    %v1319 = vsel %vm548, %v1281, 0.0
    %1320 = vadd.xlane.f32.xlu0 %v1319
    %v1321 = vpop.xlane.xlu0 %1320
    %v1322 = vsel %vm548, %v1282, 0.0
    %1323 = vadd.xlane.f32.xlu0 %v1322
    %v1324 = vpop.xlane.xlu0 %1323
    %v1325 = vsel %vm548, %v1283, 0.0
    %1326 = vadd.xlane.f32.xlu0 %v1325
    %v1327 = vpop.xlane.xlu0 %1326
    %v1328 = vsel %vm548, %v1284, 0.0
    %1329 = vadd.xlane.f32.xlu0 %v1328
    %v1330 = vpop.xlane.xlu0 %1329
    %v1331 = vsel %vm548, %v1285, 0.0
    %1332 = vadd.xlane.f32.xlu0 %v1331
    %v1333 = vpop.xlane.xlu0 %1332
    %v1335 = vlaneseq
    %v1336 = vshrl.u32 %v1335, 7
    %v1337 = vsub.s32 0, %v1336
    %v1338 = vrot.slane %v195, %v1337
    %1339 = vset.pattern.permute.xlu0 0
    %1340 = vperm.xlu0 %1339, %v1338
    %v1341 = vpop.permute.xlu0 %1340
    %v1343 = vadd.f32 %v1288, %v1341
    %v1344 = vadd.f32 %v1291, %v1341
    %v1345 = vadd.f32 %v1294, %v1341
    %v1346 = vadd.f32 %v1297, %v1341
    %v1347 = vadd.f32 %v1300, %v1341
    %v1348 = vadd.f32 %v1303, %v1341
    %v1349 = vadd.f32 %v1306, %v1341
    %v1350 = vadd.f32 %v1309, %v1341
    %v1351 = vadd.f32 %v1312, %v1341
    %v1352 = vadd.f32 %v1315, %v1341
    %v1353 = vadd.f32 %v1318, %v1341
    %v1354 = vadd.f32 %v1321, %v1341
    %v1355 = vadd.f32 %v1324, %v1341
    %v1356 = vadd.f32 %v1327, %v1341
    %v1357 = vadd.f32 %v1330, %v1341
    %v1358 = vadd.f32 %v1333, %v1341
    %v1359 = vlaneseq
    %v1360 = vshrl.u32 %v1359, 7
    %v1361 = vlaneseq
    %v1362 = vand.u32 %v1361, 127
    %vm1363 = vcmp.eq.s32.totalorder %v1360, %v1362
    %v1364 = vsub.f32 %v1343, 1e+08
    %v1365 = vsub.f32 %v1344, 1e+08
    %v1366 = vsub.f32 %v1345, 1e+08
    %v1367 = vsub.f32 %v1346, 1e+08
    %v1368 = vsub.f32 %v1347, 1e+08
    %v1369 = vsub.f32 %v1348, 1e+08
    %v1370 = vsub.f32 %v1349, 1e+08
    %v1371 = vsub.f32 %v1350, 1e+08
    %v1372 = vsub.f32 %v1351, 1e+08
    %v1373 = vsub.f32 %v1352, 1e+08
    %v1374 = vsub.f32 %v1353, 1e+08
    %v1375 = vsub.f32 %v1354, 1e+08
    %v1376 = vsub.f32 %v1355, 1e+08
    %v1377 = vsub.f32 %v1356, 1e+08
    %v1378 = vsub.f32 %v1357, 1e+08
    %v1379 = vsub.f32 %v1358, 1e+08
    %v1396 = vlaneseq
    %v1397 = vshrl.u32 %v1396, 7
    %v1398 = vsub.s32 %v1362, %v1397
    %v1399 = vrot.slane %v1364, %v1398
    %v1400 = vlaneseq
    %v1401 = vshrl.u32 %v1400, 7
    %v1402 = vsub.s32 %v1362, %v1401
    %v1403 = vrot.slane %v1365, %v1402
    %v1404 = vlaneseq
    %v1405 = vshrl.u32 %v1404, 7
    %v1406 = vsub.s32 %v1362, %v1405
    %v1407 = vrot.slane %v1366, %v1406
    %v1408 = vlaneseq
    %v1409 = vshrl.u32 %v1408, 7
    %v1410 = vsub.s32 %v1362, %v1409
    %v1411 = vrot.slane %v1367, %v1410
    %v1412 = vlaneseq
    %v1413 = vshrl.u32 %v1412, 7
    %v1414 = vsub.s32 %v1362, %v1413
    %v1415 = vrot.slane %v1368, %v1414
    %v1416 = vlaneseq
    %v1417 = vshrl.u32 %v1416, 7
    %v1418 = vsub.s32 %v1362, %v1417
    %v1419 = vrot.slane %v1369, %v1418
    %v1420 = vlaneseq
    %v1421 = vshrl.u32 %v1420, 7
    %v1422 = vsub.s32 %v1362, %v1421
    %v1423 = vrot.slane %v1370, %v1422
    %v1424 = vlaneseq
    %v1425 = vshrl.u32 %v1424, 7
    %v1426 = vsub.s32 %v1362, %v1425
    %v1427 = vrot.slane %v1371, %v1426
    %v1428 = vlaneseq
    %v1429 = vshrl.u32 %v1428, 7
    %v1430 = vsub.s32 %v1362, %v1429
    %v1431 = vrot.slane %v1372, %v1430
    %v1432 = vlaneseq
    %v1433 = vshrl.u32 %v1432, 7
    %v1434 = vsub.s32 %v1362, %v1433
    %v1435 = vrot.slane %v1373, %v1434
    %v1436 = vlaneseq
    %v1437 = vshrl.u32 %v1436, 7
    %v1438 = vsub.s32 %v1362, %v1437
    %v1439 = vrot.slane %v1374, %v1438
    %v1440 = vlaneseq
    %v1441 = vshrl.u32 %v1440, 7
    %v1442 = vsub.s32 %v1362, %v1441
    %v1443 = vrot.slane %v1375, %v1442
    %v1444 = vlaneseq
    %v1445 = vshrl.u32 %v1444, 7
    %v1446 = vsub.s32 %v1362, %v1445
    %v1447 = vrot.slane %v1376, %v1446
    %v1448 = vlaneseq
    %v1449 = vshrl.u32 %v1448, 7
    %v1450 = vsub.s32 %v1362, %v1449
    %v1451 = vrot.slane %v1377, %v1450
    %v1452 = vlaneseq
    %v1453 = vshrl.u32 %v1452, 7
    %v1454 = vsub.s32 %v1362, %v1453
    %v1455 = vrot.slane %v1378, %v1454
    %v1456 = vlaneseq
    %v1457 = vshrl.u32 %v1456, 7
    %v1458 = vsub.s32 %v1362, %v1457
    %v1459 = vrot.slane %v1379, %v1458
    %vm1460 = vcmask 1041409
    %v1461 = vsel %vm1460, %v1403, %v1399
    %vm1462 = vcmask 1042434
    %v1463 = vsel %vm1462, %v1407, %v1461
    %vm1464 = vcmask 1043459
    %v1465 = vsel %vm1464, %v1411, %v1463
    %vm1466 = vcmask 1044484
    %v1467 = vsel %vm1466, %v1415, %v1465
    %vm1468 = vcmask 1045509
    %v1469 = vsel %vm1468, %v1419, %v1467
    %vm1470 = vcmask 1046534
    %v1471 = vsel %vm1470, %v1423, %v1469
    %vm1472 = vcmask 1047559
    %v1473 = vsel %vm1472, %v1427, %v1471
    %v1474 = vsel %vm1460, %v1435, %v1431
    %v1475 = vsel %vm1462, %v1439, %v1474
    %v1476 = vsel %vm1464, %v1443, %v1475
    %v1477 = vsel %vm1466, %v1447, %v1476
    %v1478 = vsel %vm1468, %v1451, %v1477
    %v1479 = vsel %vm1470, %v1455, %v1478
    %v1480 = vsel %vm1472, %v1459, %v1479
    %v1499 = vlaneseq
    %v1500 = vshrl.u32 %v1499, 7
    %v1501 = vsub.s32 %v1362, %v1500
    %v1502 = vrot.slane %v1343, %v1501
    %v1503 = vlaneseq
    %v1504 = vshrl.u32 %v1503, 7
    %v1505 = vsub.s32 %v1362, %v1504
    %v1506 = vrot.slane %v1344, %v1505
    %v1507 = vlaneseq
    %v1508 = vshrl.u32 %v1507, 7
    %v1509 = vsub.s32 %v1362, %v1508
    %v1510 = vrot.slane %v1345, %v1509
    %v1511 = vlaneseq
    %v1512 = vshrl.u32 %v1511, 7
    %v1513 = vsub.s32 %v1362, %v1512
    %v1514 = vrot.slane %v1346, %v1513
    %v1515 = vlaneseq
    %v1516 = vshrl.u32 %v1515, 7
    %v1517 = vsub.s32 %v1362, %v1516
    %v1518 = vrot.slane %v1347, %v1517
    %v1519 = vlaneseq
    %v1520 = vshrl.u32 %v1519, 7
    %v1521 = vsub.s32 %v1362, %v1520
    %v1522 = vrot.slane %v1348, %v1521
    %v1523 = vlaneseq
    %v1524 = vshrl.u32 %v1523, 7
    %v1525 = vsub.s32 %v1362, %v1524
    %v1526 = vrot.slane %v1349, %v1525
    %v1527 = vlaneseq
    %v1528 = vshrl.u32 %v1527, 7
    %v1529 = vsub.s32 %v1362, %v1528
    %v1530 = vrot.slane %v1350, %v1529
    %v1531 = vlaneseq
    %v1532 = vshrl.u32 %v1531, 7
    %v1533 = vsub.s32 %v1362, %v1532
    %v1534 = vrot.slane %v1351, %v1533
    %v1535 = vlaneseq
    %v1536 = vshrl.u32 %v1535, 7
    %v1537 = vsub.s32 %v1362, %v1536
    %v1538 = vrot.slane %v1352, %v1537
    %v1539 = vlaneseq
    %v1540 = vshrl.u32 %v1539, 7
    %v1541 = vsub.s32 %v1362, %v1540
    %v1542 = vrot.slane %v1353, %v1541
    %v1543 = vlaneseq
    %v1544 = vshrl.u32 %v1543, 7
    %v1545 = vsub.s32 %v1362, %v1544
    %v1546 = vrot.slane %v1354, %v1545
    %v1547 = vlaneseq
    %v1548 = vshrl.u32 %v1547, 7
    %v1549 = vsub.s32 %v1362, %v1548
    %v1550 = vrot.slane %v1355, %v1549
    %v1551 = vlaneseq
    %v1552 = vshrl.u32 %v1551, 7
    %v1553 = vsub.s32 %v1362, %v1552
    %v1554 = vrot.slane %v1356, %v1553
    %v1555 = vlaneseq
    %v1556 = vshrl.u32 %v1555, 7
    %v1557 = vsub.s32 %v1362, %v1556
    %v1558 = vrot.slane %v1357, %v1557
    %v1559 = vlaneseq
    %v1560 = vshrl.u32 %v1559, 7
    %v1561 = vsub.s32 %v1362, %v1560
    %v1562 = vrot.slane %v1358, %v1561
    %v1563 = vsel %vm1460, %v1506, %v1502
    %v1564 = vsel %vm1462, %v1510, %v1563
    %v1565 = vsel %vm1464, %v1514, %v1564
    %v1566 = vsel %vm1466, %v1518, %v1565
    %v1567 = vsel %vm1468, %v1522, %v1566
    %v1568 = vsel %vm1470, %v1526, %v1567
    %v1569 = vsel %vm1472, %v1530, %v1568
    %v1570 = vsel %vm1460, %v1538, %v1534
    %v1571 = vsel %vm1462, %v1542, %v1570
    %v1572 = vsel %vm1464, %v1546, %v1571
    %v1573 = vsel %vm1466, %v1550, %v1572
    %v1574 = vsel %vm1468, %v1554, %v1573
    %v1575 = vsel %vm1470, %v1558, %v1574
    %v1576 = vsel %vm1472, %v1562, %v1575
    %v1579 = vsel %vm1363, %v1473, %v1569
    %v1580 = vsel %vm1363, %v1480, %v1576
    %vm1581 = vcmask 64512
    %v1582 = vsel %vm1581, %v1579, -inf
    %1583 = vmax.xlane.f32.xlu0 %v1582
    %v1584 = vpop.xlane.xlu0 %1583
    %v1585 = vsel %vm1581, %v1580, -inf
    %1586 = vmax.xlane.f32.xlu0 %v1585
    %v1587 = vpop.xlane.xlu0 %1586
    %v1588 = vsub.f32 %v1579, %v1584
    %v1589 = vsub.f32 %v1580, %v1587
    %v1590 = vmul.f32 %v1588, 1.442695
    %v1591 = vpow.pop %v1590
    %v1592 = vmul.f32 %v1589, 1.442695
    %v1593 = vpow.pop %v1592
    %v1594 = vsel %vm1581, %v1591, 0.0
    %1595 = vadd.xlane.f32.xlu0 %v1594
    %v1596 = vpop.xlane.xlu0 %1595
    %v1597 = vsel %vm1581, %v1593, 0.0
    %1598 = vadd.xlane.f32.xlu0 %v1597
    %v1599 = vpop.xlane.xlu0 %1598
    %v1600 = vrcp.pop %v1596
    %v1601 = vrcp.pop %v1599
    %v1602 = vmul.f32 %v1591, %v1600
    %v1603 = vmul.f32 %v1593, %v1601
    %v1604 = vpack.c.bf16 %v1602, %v1602
    %v1605 = vpack.c.bf16 %v1603, %v1603
    %vm1606 = vcmask 60416
    %1607 = vst.msk [vmem:[#allocation20] sm:$0xf] %vm1606, %v1604
    %1608 = vst.msk [vmem:[#allocation20 + $0x4] sm:$0xf] %vm1606, %v1605
    // Predicated region
    $region86: #{wcompute_forward.1} parent=1 // pred_check
      _
    $region87: #{wcompute_forward.1} parent=1 // pred_check_branch
      %1610 = sbr.rel (0) target = $region89
    $region88: #{wcompute_forward.1} parent=1 // pred_region
      %s1612 = ssub.s32 128, 128
      %1613 = vsyncadd [#allocation5], %s1612
      %s1614 = sshll.u32 [#allocation20], 4
      %s1615 = int_to_ptr.vmem [resolvable:$true] %s1614
      %1620 = dma.vmem_to_hbm [thread:$0]  %s1615, 128, %s11, [#allocation5], 64, 64, 4
    $region89: #{wcompute_forward.1} parent=1 // pred_fallthru
      _
    // Predicated region
    $region90: #{wcompute_forward.1} parent=1 // pred_check
      _
    $region91: #{wcompute_forward.1} parent=1 // pred_check_branch
      %1622 = sbr.rel (0) target = $region93
    $region92: #{wcompute_forward.1} parent=1 // pred_region
      %1623 = dma.done [#allocation5], 128
    $region93: #{wcompute_forward.1} parent=1 // pred_fallthru
      _
    %1624 = vsyncpa [#allocation4], 1
    %1625 = vsyncpa [#allocation7], 1
    %1626 = vsyncpa [#allocation10], 1
    %1627 = vsyncpa [#allocation13], 1
    %1628 = vsyncpa [#allocation16], 1
    %1629 = vsyncpa [#allocation19], 1
    %1630 = vsyncpa [#allocation5], 1

</llo_original>
